<compile_context>
chip_gen: v5e
topology: v5e:2x2
jax: 0.10.0
libtpu: 0.0.40
codegen_flags: <defaults>
</compile_context>

<pallas_src>
import numpy as np
import jax
import jax.numpy as jnp
from jax.experimental import pallas as pl
from jax.experimental.pallas import tpu as pltpu

# ----------------------------- configuration --------------------------------
B = 2                 # batch
CIN = 4               # input channels
H = W = 16            # spatial
COUT = 8              # backbone conv output channels
HIDDEN = 256          # hidden FC width (module default is 2**11; small here)
NUM_POINTS = 5
OUT_DIM = NUM_POINTS * 2

B_PAD = 8             # batch padded to a full sublane group
O_PAD = 128           # lane-dense head output width

WP = W + 2            # padded spatial width (halo of 1)
WPC = WP * CIN        # 72  : lanes of one packed, padded input row
WC = W * COUT         # 128 : lanes of one conv-output spatial row
K_CONV = 256          # 3 stacked taps * WPC = 216, zero-padded to 256 lanes

assert OUT_DIM <= O_PAD and 3 * WPC <= K_CONV


# ------------------------------- kernel --------------------------------------
def fused_kernel(x_ref, bandw_ref, cb_ref, w1_ref, b1_ref, w2_ref, b2_ref,
                 out_ref, feat_ref):
    """Single grid step: conv -> ReLU -> fc1 -> LeakyReLU -> fc2 (all in VMEM)."""
    f32 = jnp.float32

    # ---- backbone: 3x3 conv as ONE bf16 MXU matmul + bias + ReLU ------------
    # Input rows are interleaved (h, b): row = h*B_PAD + b; lanes hold the 3
    # row-shifted taps x (wp, cin), matching the banded weight built offline.
    conv = jnp.dot(x_ref[...], bandw_ref[...], preferred_element_type=f32)
    feat_ref[...] = jnp.maximum(conv + cb_ref[...], 0.0)          # (128, 128) f32

    # ---- fc1: sum of H per-row-group matmuls, accumulated in vregs ----------
    # out1[b, n] = sum_h feat[h*B_PAD + b, :] @ w1[h]  (bf16 x bf16, f32 acc)
    acc = jnp.zeros((B_PAD, HIDDEN), f32)
    for h in range(H):                                            # static unroll
        lhs = feat_ref[h * B_PAD:(h + 1) * B_PAD, :].astype(jnp.bfloat16)
        acc = acc + jnp.dot(lhs, w1_ref[h], preferred_element_type=f32)
    h1 = acc + b1_ref[...]
    h1 = jnp.where(h1 > 0.0, h1, 0.05 * h1)                       # LeakyReLU(0.05)
    h1 = h1.astype(jnp.bfloat16)

    # ---- fc2: bf16 x bf16 matmul + bias, lane-dense (8, 128) output ---------
    out_ref[...] = jnp.dot(h1, w2_ref[...], preferred_element_type=f32) + b2_ref[...]


def _fused_call(x_stack, bandw, cb_row, w1, b1, w2, b2):
    flops = (2 * (H * B_PAD) * K_CONV * WC            # conv
             + 2 * B_PAD * (H * WC) * HIDDEN          # fc1
             + 2 * B_PAD * HIDDEN * O_PAD)            # fc2
    bytes_accessed = (x_stack.size * 2 + bandw.size * 2 + cb_row.size * 4
                      + w1.size * 2 + b1.size * 4 + w2.size * 2 + b2.size * 4
                      + B_PAD * O_PAD * 4)
    return pl.pallas_call(
        fused_kernel,
        out_shape=jax.ShapeDtypeStruct((B_PAD, O_PAD), jnp.float32),
        grid_spec=pltpu.PrefetchScalarGridSpec(
            num_scalar_prefetch=0,
            grid=(1,),
            in_specs=[
                pl.BlockSpec((H * B_PAD, K_CONV), lambda i: (0, 0)),   # stacked input taps
                pl.BlockSpec((K_CONV, WC), lambda i: (0, 0)),          # banded conv weight
                pl.BlockSpec((1, WC), lambda i: (0, 0)),               # conv bias row
                pl.BlockSpec((H, WC, HIDDEN), lambda i: (0, 0, 0)),    # fc1 weight
                pl.BlockSpec((1, HIDDEN), lambda i: (0, 0)),           # fc1 bias
                pl.BlockSpec((HIDDEN, O_PAD), lambda i: (0, 0)),       # fc2 weight (padded)
                pl.BlockSpec((1, O_PAD), lambda i: (0, 0)),            # fc2 bias (padded)
            ],
            out_specs=pl.BlockSpec((B_PAD, O_PAD), lambda i: (0, 0)),
            scratch_shapes=[pltpu.VMEM((H * B_PAD, WC), jnp.float32)],  # conv feature map
        ),
        compiler_params=pltpu.CompilerParams(
            dimension_semantics=("arbitrary",),
            vmem_limit_bytes=32 * 1024 * 1024,
        ),
        cost_estimate=pl.CostEstimate(flops=flops, transcendentals=0,
                                      bytes_accessed=bytes_accessed),
    )(x_stack, bandw, cb_row, w1, b1, w2, b2)


# ------------------------------- forward -------------------------------------
def _pack_input(x_nchw):
    """NCHW input -> (H*B_PAD, K_CONV) bf16 with rows (h, b) and lanes
    (tap di, padded col wp, cin); single small XLA fusion per call."""
    x_nhwc = jnp.transpose(x_nchw, (0, 2, 3, 1))                         # (B,H,W,CIN)
    x_p = jnp.pad(x_nhwc, ((0, B_PAD - B), (1, 1), (1, 1), (0, 0)))      # (8,18,18,4)
    taps = jnp.stack([x_p[:, di:di + H] for di in range(3)], axis=0)     # (3,8,16,18,4)
    x_stack = jnp.transpose(taps, (2, 1, 0, 3, 4)).reshape(H * B_PAD, 3 * WPC)
    x_stack = jnp.pad(x_stack, ((0, 0), (0, K_CONV - 3 * WPC)))
    return x_stack.astype(jnp.bfloat16)


def face_regression_forward(x_nchw, kp):
    """Matches FaceRegressionModel.forward for the instantiated backbone."""
    x_stack = _pack_input(x_nchw)
    out = _fused_call(x_stack, kp["bandw"], kp["cb_row"], kp["w1"], kp["b1"],
                      kp["w2"], kp["b2"])
    return out[:B, :OUT_DIM].reshape(B, NUM_POINTS, 2)


# --------------------------- parameter handling -------------------------------
def init_torch_style_params(key):
    """Synthetic parameters in PyTorch layouts (OIHW conv, (out,in) Linear)."""
    ks = jax.random.split(key, 6)
    flat = COUT * H * W
    return dict(
        conv_w=jax.random.normal(ks[0], (COUT, CIN, 3, 3), jnp.float32) * 0.05,
        conv_b=jax.random.normal(ks[1], (COUT,), jnp.float32) * 0.01,
        fc1_w=jax.random.normal(ks[2], (HIDDEN, flat), jnp.float32) * 0.02,
        fc1_b=jax.random.normal(ks[3], (HIDDEN,), jnp.float32) * 0.01,
        fc2_w=jax.random.normal(ks[4], (OUT_DIM, HIDDEN), jnp.float32) * 0.02,
        fc2_b=jax.random.normal(ks[5], (OUT_DIM,), jnp.float32) * 0.01,
    )


def _bf16_quantize(w):
    return w.astype(jnp.bfloat16).astype(jnp.float32)


def prepare_kernel_params(p):
    """Offline weight preprocessing: bf16 quantization, stacked banded conv
    weights, NCHW-flatten permutation folded into fc1 rows, lane-padded fc2."""
    conv_w = np.asarray(_bf16_quantize(p["conv_w"]))   # (COUT, CIN, 3, 3)
    fc1_w = _bf16_quantize(p["fc1_w"])                 # (HIDDEN, COUT*H*W)
    fc2_w = _bf16_quantize(p["fc2_w"])                 # (OUT_DIM, HIDDEN)

    # stacked banded conv weight:
    #   band[di*WPC + (w+dj)*CIN + ci, w*COUT + co] = conv_w[co, ci, di, dj]
    w_t = np.transpose(conv_w, (2, 3, 1, 0))           # (kh, kw, CIN, COUT)
    band = np.zeros((K_CONV, WC), np.float32)
    for di in range(3):
        for dj in range(3):
            for w in range(W):
                band[di * WPC + (w + dj) * CIN: di * WPC + (w + dj + 1) * CIN,
                     w * COUT:(w + 1) * COUT] = w_t[di, dj]
    bandw = jnp.asarray(band, dtype=jnp.bfloat16)
    cb_row = jnp.tile(p["conv_b"].astype(jnp.float32)[None, :], (1, W))   # (1, WC)

    # fc1: rows are in PyTorch NCHW-flatten order (c, h, w); reorder to the
    # kernel's (h, w, c) feature layout and reshape to (H, W*COUT, HIDDEN).
    w1 = fc1_w.T.reshape(COUT, H, W, HIDDEN)
    w1 = jnp.transpose(w1, (1, 2, 0, 3)).reshape(H, WC, HIDDEN).astype(jnp.bfloat16)
    b1 = p["fc1_b"].astype(jnp.float32)[None, :]                          # (1, HIDDEN)

    # fc2: zero-pad the 10 output columns to a lane-dense 128.
    w2 = jnp.zeros((HIDDEN, O_PAD), jnp.float32).at[:, :OUT_DIM].set(fc2_w.T)
    b2 = jnp.zeros((1, O_PAD), jnp.float32).at[0, :OUT_DIM].set(p["fc2_b"])
    return dict(bandw=bandw, cb_row=cb_row, w1=w1, b1=b1,
                w2=w2.astype(jnp.bfloat16), b2=b2)


# ------------------------------- reference ------------------------------------
def reference_forward(x_nchw, p):
    """Plain-JAX forward with PyTorch semantics (same bf16-quantized weights
    and bf16-quantized input; activations kept in f32)."""
    hi = jax.lax.Precision.HIGHEST
    x_q = _bf16_quantize(x_nchw)
    conv_w = _bf16_quantize(p["conv_w"])
    y = jax.lax.conv_general_dilated(
        x_q, conv_w, window_strides=(1, 1), padding=((1, 1), (1, 1)),
        dimension_numbers=("NCHW", "OIHW", "NCHW"), precision=hi)
    y = jnp.maximum(y + p["conv_b"][None, :, None, None], 0.0)   # backbone ReLU
    flat = y.reshape(x_nchw.shape[0], -1)                        # NCHW flatten
    h1 = jnp.dot(flat, _bf16_quantize(p["fc1_w"]).T, precision=hi) + p["fc1_b"]
    h1 = jnp.where(h1 > 0.0, h1, 0.05 * h1)                      # LeakyReLU(0.05)
    o = jnp.dot(h1, _bf16_quantize(p["fc2_w"]).T, precision=hi) + p["fc2_b"]
    return o.reshape(x_nchw.shape[0], NUM_POINTS, -1)


if __name__ == "__main__":
    key = jax.random.PRNGKey(0)
    k_x, k_p = jax.random.split(key)
    x = jax.random.normal(k_x, (B, CIN, H, W), jnp.float32)

    params = init_torch_style_params(k_p)
    kparams = prepare_kernel_params(params)

    fwd = jax.jit(face_regression_forward)
    out = jax.block_until_ready(fwd(x, kparams))

    assert out.shape == (B, NUM_POINTS, 2), out.shape
    assert out.dtype == jnp.float32

    ref = reference_forward(x, params)
    max_err = float(jnp.max(jnp.abs(out - ref)))
    # kernel uses bf16 activations into the MXU (f32 accumulation); reference
    # keeps f32 activations, hence the slightly loosened tolerance.
    assert jnp.allclose(out, ref, atol=5e-3, rtol=5e-2), f"max_err={max_err}"

    print("KERNEL_OK")
</pallas_src>

<mosaic_0001>
module attributes {stable_mosaic.version = 11 : i64} {
  func.func @fused_kernel(%arg0: i32, %arg1: memref<128x256xbf16, #tpu.memory_space<vmem>>, %arg2: memref<256x128xbf16, #tpu.memory_space<vmem>>, %arg3: memref<1x128xf32, #tpu.memory_space<vmem>>, %arg4: memref<16x128x256xbf16, #tpu.memory_space<vmem>>, %arg5: memref<1x256xf32, #tpu.memory_space<vmem>>, %arg6: memref<256x128xbf16, #tpu.memory_space<vmem>>, %arg7: memref<1x128xf32, #tpu.memory_space<vmem>>, %arg8: memref<8x128xf32, #tpu.memory_space<vmem>>, %arg9: memref<128x128xf32, #tpu.memory_space<vmem>>) attributes {dimension_semantics = [#tpu.dimension_semantics<arbitrary>], iteration_bounds = array<i64: 1>, scalar_prefetch = 0 : i64, scratch_operands = 1 : i64, tpu.core_type = #tpu.core_type<tc>, window_params = [{pipeline_mode = #tpu.pipeline_mode<synchronous>, transform_indices = @transform_0, window_bounds = array<i64: 128, 256>}, {pipeline_mode = #tpu.pipeline_mode<synchronous>, transform_indices = @transform_1, window_bounds = array<i64: 256, 128>}, {pipeline_mode = #tpu.pipeline_mode<synchronous>, transform_indices = @transform_2, window_bounds = array<i64: 1, 128>}, {pipeline_mode = #tpu.pipeline_mode<synchronous>, transform_indices = @transform_3, window_bounds = array<i64: 16, 128, 256>}, {pipeline_mode = #tpu.pipeline_mode<synchronous>, transform_indices = @transform_4, window_bounds = array<i64: 1, 256>}, {pipeline_mode = #tpu.pipeline_mode<synchronous>, transform_indices = @transform_5, window_bounds = array<i64: 256, 128>}, {pipeline_mode = #tpu.pipeline_mode<synchronous>, transform_indices = @transform_6, window_bounds = array<i64: 1, 128>}, {pipeline_mode = #tpu.pipeline_mode<synchronous>, transform_indices = @transform_7, window_bounds = array<i64: 8, 128>}]} {
    %c0 = arith.constant 0 : index
    %c0_0 = arith.constant 0 : index
    %0 = vector.load %arg1[%c0, %c0_0] : memref<128x256xbf16, #tpu.memory_space<vmem>>, vector<128x256xbf16>
    %c0_1 = arith.constant 0 : index
    %c0_2 = arith.constant 0 : index
    %1 = vector.load %arg2[%c0_1, %c0_2] : memref<256x128xbf16, #tpu.memory_space<vmem>>, vector<256x128xbf16>
    %cst = arith.constant dense<0.000000e+00> : vector<128x128xf32>
    %2 = tpu.matmul %0, %1, %cst {dimension_numbers = #tpu.dot_dimension_numbers<[1], [0], [0], [1], [0, 0, 1, 1], [], []>} : vector<128x256xbf16>, vector<256x128xbf16>, vector<128x128xf32> -> vector<128x128xf32>
    %c0_3 = arith.constant 0 : index
    %c0_4 = arith.constant 0 : index
    %3 = vector.load %arg3[%c0_3, %c0_4] : memref<1x128xf32, #tpu.memory_space<vmem>>, vector<1x128xf32>
    %4 = vector.broadcast %3 : vector<1x128xf32> to vector<128x128xf32>
    %5 = arith.addf %2, %4 : vector<128x128xf32>
    %cst_5 = arith.constant 0.000000e+00 : f32
    %6 = vector.broadcast %cst_5 : f32 to vector<128x128xf32>
    %7 = arith.maximumf %5, %6 : vector<128x128xf32>
    %c0_6 = arith.constant 0 : index
    %c0_7 = arith.constant 0 : index
    %8 = vector.load %arg9[%c0_6, %c0_7] : memref<128x128xf32, #tpu.memory_space<vmem>>, vector<128x128xf32>
    tpu.vector_store %arg9[%c0_6, %c0_7], %7 {strides = array<i32>} : memref<128x128xf32, #tpu.memory_space<vmem>>, vector<128x128xf32>,
    %cst_8 = arith.constant 0.000000e+00 : f32
    %9 = vector.broadcast %cst_8 : f32 to vector<8x256xf32>
    %c0_9 = arith.constant 0 : index
    %c0_10 = arith.constant 0 : index
    %10 = vector.load %arg9[%c0_9, %c0_10] : memref<128x128xf32, #tpu.memory_space<vmem>>, vector<8x128xf32>
    %11 = arith.truncf %10 : vector<8x128xf32> to vector<8x128xbf16>
    %c0_11 = arith.constant 0 : index
    %c0_12 = arith.constant 0 : index
    %c0_13 = arith.constant 0 : index
    %12 = vector.load %arg4[%c0_11, %c0_12, %c0_13] : memref<16x128x256xbf16, #tpu.memory_space<vmem>>, vector<1x128x256xbf16>
    %13 = vector.shape_cast %12 : vector<1x128x256xbf16> to vector<128x256xbf16>
    %cst_14 = arith.constant dense<0.000000e+00> : vector<8x256xf32>
    %14 = tpu.matmul %11, %13, %cst_14 {dimension_numbers = #tpu.dot_dimension_numbers<[1], [0], [0], [1], [0, 0, 1, 1], [], []>} : vector<8x128xbf16>, vector<128x256xbf16>, vector<8x256xf32> -> vector<8x256xf32>
    %15 = arith.addf %9, %14 : vector<8x256xf32>
    %c8 = arith.constant 8 : index
    %c0_15 = arith.constant 0 : index
    %16 = vector.load %arg9[%c8, %c0_15] : memref<128x128xf32, #tpu.memory_space<vmem>>, vector<8x128xf32>
    %17 = arith.truncf %16 : vector<8x128xf32> to vector<8x128xbf16>
    %c1 = arith.constant 1 : index
    %c0_16 = arith.constant 0 : index
    %c0_17 = arith.constant 0 : index
    %18 = vector.load %arg4[%c1, %c0_16, %c0_17] : memref<16x128x256xbf16, #tpu.memory_space<vmem>>, vector<1x128x256xbf16>
    %19 = vector.shape_cast %18 : vector<1x128x256xbf16> to vector<128x256xbf16>
    %cst_18 = arith.constant dense<0.000000e+00> : vector<8x256xf32>
    %20 = tpu.matmul %17, %19, %cst_18 {dimension_numbers = #tpu.dot_dimension_numbers<[1], [0], [0], [1], [0, 0, 1, 1], [], []>} : vector<8x128xbf16>, vector<128x256xbf16>, vector<8x256xf32> -> vector<8x256xf32>
    %21 = arith.addf %15, %20 : vector<8x256xf32>
    %c16 = arith.constant 16 : index
    %c0_19 = arith.constant 0 : index
    %22 = vector.load %arg9[%c16, %c0_19] : memref<128x128xf32, #tpu.memory_space<vmem>>, vector<8x128xf32>
    %23 = arith.truncf %22 : vector<8x128xf32> to vector<8x128xbf16>
    %c2 = arith.constant 2 : index
    %c0_20 = arith.constant 0 : index
    %c0_21 = arith.constant 0 : index
    %24 = vector.load %arg4[%c2, %c0_20, %c0_21] : memref<16x128x256xbf16, #tpu.memory_space<vmem>>, vector<1x128x256xbf16>
    %25 = vector.shape_cast %24 : vector<1x128x256xbf16> to vector<128x256xbf16>
    %cst_22 = arith.constant dense<0.000000e+00> : vector<8x256xf32>
    %26 = tpu.matmul %23, %25, %cst_22 {dimension_numbers = #tpu.dot_dimension_numbers<[1], [0], [0], [1], [0, 0, 1, 1], [], []>} : vector<8x128xbf16>, vector<128x256xbf16>, vector<8x256xf32> -> vector<8x256xf32>
    %27 = arith.addf %21, %26 : vector<8x256xf32>
    %c24 = arith.constant 24 : index
    %c0_23 = arith.constant 0 : index
    %28 = vector.load %arg9[%c24, %c0_23] : memref<128x128xf32, #tpu.memory_space<vmem>>, vector<8x128xf32>
    %29 = arith.truncf %28 : vector<8x128xf32> to vector<8x128xbf16>
    %c3 = arith.constant 3 : index
    %c0_24 = arith.constant 0 : index
    %c0_25 = arith.constant 0 : index
    %30 = vector.load %arg4[%c3, %c0_24, %c0_25] : memref<16x128x256xbf16, #tpu.memory_space<vmem>>, vector<1x128x256xbf16>
    %31 = vector.shape_cast %30 : vector<1x128x256xbf16> to vector<128x256xbf16>
    %cst_26 = arith.constant dense<0.000000e+00> : vector<8x256xf32>
    %32 = tpu.matmul %29, %31, %cst_26 {dimension_numbers = #tpu.dot_dimension_numbers<[1], [0], [0], [1], [0, 0, 1, 1], [], []>} : vector<8x128xbf16>, vector<128x256xbf16>, vector<8x256xf32> -> vector<8x256xf32>
    %33 = arith.addf %27, %32 : vector<8x256xf32>
    %c32 = arith.constant 32 : index
    %c0_27 = arith.constant 0 : index
    %34 = vector.load %arg9[%c32, %c0_27] : memref<128x128xf32, #tpu.memory_space<vmem>>, vector<8x128xf32>
    %35 = arith.truncf %34 : vector<8x128xf32> to vector<8x128xbf16>
    %c4 = arith.constant 4 : index
    %c0_28 = arith.constant 0 : index
    %c0_29 = arith.constant 0 : index
    %36 = vector.load %arg4[%c4, %c0_28, %c0_29] : memref<16x128x256xbf16, #tpu.memory_space<vmem>>, vector<1x128x256xbf16>
    %37 = vector.shape_cast %36 : vector<1x128x256xbf16> to vector<128x256xbf16>
    %cst_30 = arith.constant dense<0.000000e+00> : vector<8x256xf32>
    %38 = tpu.matmul %35, %37, %cst_30 {dimension_numbers = #tpu.dot_dimension_numbers<[1], [0], [0], [1], [0, 0, 1, 1], [], []>} : vector<8x128xbf16>, vector<128x256xbf16>, vector<8x256xf32> -> vector<8x256xf32>
    %39 = arith.addf %33, %38 : vector<8x256xf32>
    %c40 = arith.constant 40 : index
    %c0_31 = arith.constant 0 : index
    %40 = vector.load %arg9[%c40, %c0_31] : memref<128x128xf32, #tpu.memory_space<vmem>>, vector<8x128xf32>
    %41 = arith.truncf %40 : vector<8x128xf32> to vector<8x128xbf16>
    %c5 = arith.constant 5 : index
    %c0_32 = arith.constant 0 : index
    %c0_33 = arith.constant 0 : index
    %42 = vector.load %arg4[%c5, %c0_32, %c0_33] : memref<16x128x256xbf16, #tpu.memory_space<vmem>>, vector<1x128x256xbf16>
    %43 = vector.shape_cast %42 : vector<1x128x256xbf16> to vector<128x256xbf16>
    %cst_34 = arith.constant dense<0.000000e+00> : vector<8x256xf32>
    %44 = tpu.matmul %41, %43, %cst_34 {dimension_numbers = #tpu.dot_dimension_numbers<[1], [0], [0], [1], [0, 0, 1, 1], [], []>} : vector<8x128xbf16>, vector<128x256xbf16>, vector<8x256xf32> -> vector<8x256xf32>
    %45 = arith.addf %39, %44 : vector<8x256xf32>
    %c48 = arith.constant 48 : index
    %c0_35 = arith.constant 0 : index
    %46 = vector.load %arg9[%c48, %c0_35] : memref<128x128xf32, #tpu.memory_space<vmem>>, vector<8x128xf32>
    %47 = arith.truncf %46 : vector<8x128xf32> to vector<8x128xbf16>
    %c6 = arith.constant 6 : index
    %c0_36 = arith.constant 0 : index
    %c0_37 = arith.constant 0 : index
    %48 = vector.load %arg4[%c6, %c0_36, %c0_37] : memref<16x128x256xbf16, #tpu.memory_space<vmem>>, vector<1x128x256xbf16>
    %49 = vector.shape_cast %48 : vector<1x128x256xbf16> to vector<128x256xbf16>
    %cst_38 = arith.constant dense<0.000000e+00> : vector<8x256xf32>
    %50 = tpu.matmul %47, %49, %cst_38 {dimension_numbers = #tpu.dot_dimension_numbers<[1], [0], [0], [1], [0, 0, 1, 1], [], []>} : vector<8x128xbf16>, vector<128x256xbf16>, vector<8x256xf32> -> vector<8x256xf32>
    %51 = arith.addf %45, %50 : vector<8x256xf32>
    %c56 = arith.constant 56 : index
    %c0_39 = arith.constant 0 : index
    %52 = vector.load %arg9[%c56, %c0_39] : memref<128x128xf32, #tpu.memory_space<vmem>>, vector<8x128xf32>
    %53 = arith.truncf %52 : vector<8x128xf32> to vector<8x128xbf16>
    %c7 = arith.constant 7 : index
    %c0_40 = arith.constant 0 : index
    %c0_41 = arith.constant 0 : index
    %54 = vector.load %arg4[%c7, %c0_40, %c0_41] : memref<16x128x256xbf16, #tpu.memory_space<vmem>>, vector<1x128x256xbf16>
    %55 = vector.shape_cast %54 : vector<1x128x256xbf16> to vector<128x256xbf16>
    %cst_42 = arith.constant dense<0.000000e+00> : vector<8x256xf32>
    %56 = tpu.matmul %53, %55, %cst_42 {dimension_numbers = #tpu.dot_dimension_numbers<[1], [0], [0], [1], [0, 0, 1, 1], [], []>} : vector<8x128xbf16>, vector<128x256xbf16>, vector<8x256xf32> -> vector<8x256xf32>
    %57 = arith.addf %51, %56 : vector<8x256xf32>
    %c64 = arith.constant 64 : index
    %c0_43 = arith.constant 0 : index
    %58 = vector.load %arg9[%c64, %c0_43] : memref<128x128xf32, #tpu.memory_space<vmem>>, vector<8x128xf32>
    %59 = arith.truncf %58 : vector<8x128xf32> to vector<8x128xbf16>
    %c8_44 = arith.constant 8 : index
    %c0_45 = arith.constant 0 : index
    %c0_46 = arith.constant 0 : index
    %60 = vector.load %arg4[%c8_44, %c0_45, %c0_46] : memref<16x128x256xbf16, #tpu.memory_space<vmem>>, vector<1x128x256xbf16>
    %61 = vector.shape_cast %60 : vector<1x128x256xbf16> to vector<128x256xbf16>
    %cst_47 = arith.constant dense<0.000000e+00> : vector<8x256xf32>
    %62 = tpu.matmul %59, %61, %cst_47 {dimension_numbers = #tpu.dot_dimension_numbers<[1], [0], [0], [1], [0, 0, 1, 1], [], []>} : vector<8x128xbf16>, vector<128x256xbf16>, vector<8x256xf32> -> vector<8x256xf32>
    %63 = arith.addf %57, %62 : vector<8x256xf32>
    %c72 = arith.constant 72 : index
    %c0_48 = arith.constant 0 : index
    %64 = vector.load %arg9[%c72, %c0_48] : memref<128x128xf32, #tpu.memory_space<vmem>>, vector<8x128xf32>
    %65 = arith.truncf %64 : vector<8x128xf32> to vector<8x128xbf16>
    %c9 = arith.constant 9 : index
    %c0_49 = arith.constant 0 : index
    %c0_50 = arith.constant 0 : index
    %66 = vector.load %arg4[%c9, %c0_49, %c0_50] : memref<16x128x256xbf16, #tpu.memory_space<vmem>>, vector<1x128x256xbf16>
    %67 = vector.shape_cast %66 : vector<1x128x256xbf16> to vector<128x256xbf16>
    %cst_51 = arith.constant dense<0.000000e+00> : vector<8x256xf32>
    %68 = tpu.matmul %65, %67, %cst_51 {dimension_numbers = #tpu.dot_dimension_numbers<[1], [0], [0], [1], [0, 0, 1, 1], [], []>} : vector<8x128xbf16>, vector<128x256xbf16>, vector<8x256xf32> -> vector<8x256xf32>
    %69 = arith.addf %63, %68 : vector<8x256xf32>
    %c80 = arith.constant 80 : index
    %c0_52 = arith.constant 0 : index
    %70 = vector.load %arg9[%c80, %c0_52] : memref<128x128xf32, #tpu.memory_space<vmem>>, vector<8x128xf32>
    %71 = arith.truncf %70 : vector<8x128xf32> to vector<8x128xbf16>
    %c10 = arith.constant 10 : index
    %c0_53 = arith.constant 0 : index
    %c0_54 = arith.constant 0 : index
    %72 = vector.load %arg4[%c10, %c0_53, %c0_54] : memref<16x128x256xbf16, #tpu.memory_space<vmem>>, vector<1x128x256xbf16>
    %73 = vector.shape_cast %72 : vector<1x128x256xbf16> to vector<128x256xbf16>
    %cst_55 = arith.constant dense<0.000000e+00> : vector<8x256xf32>
    %74 = tpu.matmul %71, %73, %cst_55 {dimension_numbers = #tpu.dot_dimension_numbers<[1], [0], [0], [1], [0, 0, 1, 1], [], []>} : vector<8x128xbf16>, vector<128x256xbf16>, vector<8x256xf32> -> vector<8x256xf32>
    %75 = arith.addf %69, %74 : vector<8x256xf32>
    %c88 = arith.constant 88 : index
    %c0_56 = arith.constant 0 : index
    %76 = vector.load %arg9[%c88, %c0_56] : memref<128x128xf32, #tpu.memory_space<vmem>>, vector<8x128xf32>
    %77 = arith.truncf %76 : vector<8x128xf32> to vector<8x128xbf16>
    %c11 = arith.constant 11 : index
    %c0_57 = arith.constant 0 : index
    %c0_58 = arith.constant 0 : index
    %78 = vector.load %arg4[%c11, %c0_57, %c0_58] : memref<16x128x256xbf16, #tpu.memory_space<vmem>>, vector<1x128x256xbf16>
    %79 = vector.shape_cast %78 : vector<1x128x256xbf16> to vector<128x256xbf16>
    %cst_59 = arith.constant dense<0.000000e+00> : vector<8x256xf32>
    %80 = tpu.matmul %77, %79, %cst_59 {dimension_numbers = #tpu.dot_dimension_numbers<[1], [0], [0], [1], [0, 0, 1, 1], [], []>} : vector<8x128xbf16>, vector<128x256xbf16>, vector<8x256xf32> -> vector<8x256xf32>
    %81 = arith.addf %75, %80 : vector<8x256xf32>
    %c96 = arith.constant 96 : index
    %c0_60 = arith.constant 0 : index
    %82 = vector.load %arg9[%c96, %c0_60] : memref<128x128xf32, #tpu.memory_space<vmem>>, vector<8x128xf32>
    %83 = arith.truncf %82 : vector<8x128xf32> to vector<8x128xbf16>
    %c12 = arith.constant 12 : index
    %c0_61 = arith.constant 0 : index
    %c0_62 = arith.constant 0 : index
    %84 = vector.load %arg4[%c12, %c0_61, %c0_62] : memref<16x128x256xbf16, #tpu.memory_space<vmem>>, vector<1x128x256xbf16>
    %85 = vector.shape_cast %84 : vector<1x128x256xbf16> to vector<128x256xbf16>
    %cst_63 = arith.constant dense<0.000000e+00> : vector<8x256xf32>
    %86 = tpu.matmul %83, %85, %cst_63 {dimension_numbers = #tpu.dot_dimension_numbers<[1], [0], [0], [1], [0, 0, 1, 1], [], []>} : vector<8x128xbf16>, vector<128x256xbf16>, vector<8x256xf32> -> vector<8x256xf32>
    %87 = arith.addf %81, %86 : vector<8x256xf32>
    %c104 = arith.constant 104 : index
    %c0_64 = arith.constant 0 : index
    %88 = vector.load %arg9[%c104, %c0_64] : memref<128x128xf32, #tpu.memory_space<vmem>>, vector<8x128xf32>
    %89 = arith.truncf %88 : vector<8x128xf32> to vector<8x128xbf16>
    %c13 = arith.constant 13 : index
    %c0_65 = arith.constant 0 : index
    %c0_66 = arith.constant 0 : index
    %90 = vector.load %arg4[%c13, %c0_65, %c0_66] : memref<16x128x256xbf16, #tpu.memory_space<vmem>>, vector<1x128x256xbf16>
    %91 = vector.shape_cast %90 : vector<1x128x256xbf16> to vector<128x256xbf16>
    %cst_67 = arith.constant dense<0.000000e+00> : vector<8x256xf32>
    %92 = tpu.matmul %89, %91, %cst_67 {dimension_numbers = #tpu.dot_dimension_numbers<[1], [0], [0], [1], [0, 0, 1, 1], [], []>} : vector<8x128xbf16>, vector<128x256xbf16>, vector<8x256xf32> -> vector<8x256xf32>
    %93 = arith.addf %87, %92 : vector<8x256xf32>
    %c112 = arith.constant 112 : index
    %c0_68 = arith.constant 0 : index
    %94 = vector.load %arg9[%c112, %c0_68] : memref<128x128xf32, #tpu.memory_space<vmem>>, vector<8x128xf32>
    %95 = arith.truncf %94 : vector<8x128xf32> to vector<8x128xbf16>
    %c14 = arith.constant 14 : index
    %c0_69 = arith.constant 0 : index
    %c0_70 = arith.constant 0 : index
    %96 = vector.load %arg4[%c14, %c0_69, %c0_70] : memref<16x128x256xbf16, #tpu.memory_space<vmem>>, vector<1x128x256xbf16>
    %97 = vector.shape_cast %96 : vector<1x128x256xbf16> to vector<128x256xbf16>
    %cst_71 = arith.constant dense<0.000000e+00> : vector<8x256xf32>
    %98 = tpu.matmul %95, %97, %cst_71 {dimension_numbers = #tpu.dot_dimension_numbers<[1], [0], [0], [1], [0, 0, 1, 1], [], []>} : vector<8x128xbf16>, vector<128x256xbf16>, vector<8x256xf32> -> vector<8x256xf32>
    %99 = arith.addf %93, %98 : vector<8x256xf32>
    %c120 = arith.constant 120 : index
    %c0_72 = arith.constant 0 : index
    %100 = vector.load %arg9[%c120, %c0_72] : memref<128x128xf32, #tpu.memory_space<vmem>>, vector<8x128xf32>
    %101 = arith.truncf %100 : vector<8x128xf32> to vector<8x128xbf16>
    %c15 = arith.constant 15 : index
    %c0_73 = arith.constant 0 : index
    %c0_74 = arith.constant 0 : index
    %102 = vector.load %arg4[%c15, %c0_73, %c0_74] : memref<16x128x256xbf16, #tpu.memory_space<vmem>>, vector<1x128x256xbf16>
    %103 = vector.shape_cast %102 : vector<1x128x256xbf16> to vector<128x256xbf16>
    %cst_75 = arith.constant dense<0.000000e+00> : vector<8x256xf32>
    %104 = tpu.matmul %101, %103, %cst_75 {dimension_numbers = #tpu.dot_dimension_numbers<[1], [0], [0], [1], [0, 0, 1, 1], [], []>} : vector<8x128xbf16>, vector<128x256xbf16>, vector<8x256xf32> -> vector<8x256xf32>
    %105 = arith.addf %99, %104 : vector<8x256xf32>
    %c0_76 = arith.constant 0 : index
    %c0_77 = arith.constant 0 : index
    %106 = vector.load %arg5[%c0_76, %c0_77] : memref<1x256xf32, #tpu.memory_space<vmem>>, vector<1x256xf32>
    %107 = vector.broadcast %106 : vector<1x256xf32> to vector<8x256xf32>
    %108 = arith.addf %105, %107 : vector<8x256xf32>
    %cst_78 = arith.constant 0.000000e+00 : f32
    %109 = vector.broadcast %cst_78 : f32 to vector<8x256xf32>
    %110 = arith.cmpf ogt, %108, %109 : vector<8x256xf32>
    %cst_79 = arith.constant 5.000000e-02 : f32
    %111 = vector.broadcast %cst_79 : f32 to vector<8x256xf32>
    %112 = arith.mulf %111, %108 : vector<8x256xf32>
    %113 = arith.select %110, %108, %112 : vector<8x256xi1>, vector<8x256xf32>
    %114 = arith.truncf %113 : vector<8x256xf32> to vector<8x256xbf16>
    %c0_80 = arith.constant 0 : index
    %c0_81 = arith.constant 0 : index
    %115 = vector.load %arg6[%c0_80, %c0_81] : memref<256x128xbf16, #tpu.memory_space<vmem>>, vector<256x128xbf16>
    %cst_82 = arith.constant dense<0.000000e+00> : vector<8x128xf32>
    %116 = tpu.matmul %114, %115, %cst_82 {dimension_numbers = #tpu.dot_dimension_numbers<[1], [0], [0], [1], [0, 0, 1, 1], [], []>} : vector<8x256xbf16>, vector<256x128xbf16>, vector<8x128xf32> -> vector<8x128xf32>
    %c0_83 = arith.constant 0 : index
    %c0_84 = arith.constant 0 : index
    %117 = vector.load %arg7[%c0_83, %c0_84] : memref<1x128xf32, #tpu.memory_space<vmem>>, vector<1x128xf32>
    %118 = vector.broadcast %117 : vector<1x128xf32> to vector<8x128xf32>
    %119 = arith.addf %116, %118 : vector<8x128xf32>
    %c0_85 = arith.constant 0 : index
    %c0_86 = arith.constant 0 : index
    %120 = vector.load %arg8[%c0_85, %c0_86] : memref<8x128xf32, #tpu.memory_space<vmem>>, vector<8x128xf32>
    tpu.vector_store %arg8[%c0_85, %c0_86], %119 {strides = array<i32>} : memref<8x128xf32, #tpu.memory_space<vmem>>, vector<8x128xf32>,
    return
  }
  func.func @transform_0(%arg0: i32) -> (i32, i32) {
    %c0_i32 = arith.constant 0 : i32
    %c0_i32_0 = arith.constant 0 : i32
    %c0_i32_1 = arith.constant 0 : i32
    return %c0_i32, %c0_i32_0 : i32, i32
  }
  func.func @transform_1(%arg0: i32) -> (i32, i32) {
    %c0_i32 = arith.constant 0 : i32
    %c0_i32_0 = arith.constant 0 : i32
    %c0_i32_1 = arith.constant 0 : i32
    return %c0_i32, %c0_i32_0 : i32, i32
  }
  func.func @transform_2(%arg0: i32) -> (i32, i32) {
    %c0_i32 = arith.constant 0 : i32
    %c0_i32_0 = arith.constant 0 : i32
    %c0_i32_1 = arith.constant 0 : i32
    return %c0_i32, %c0_i32_0 : i32, i32
  }
  func.func @transform_3(%arg0: i32) -> (i32, i32, i32) {
    %c0_i32 = arith.constant 0 : i32
    %c0_i32_0 = arith.constant 0 : i32
    %c0_i32_1 = arith.constant 0 : i32
    %c0_i32_2 = arith.constant 0 : i32
    return %c0_i32, %c0_i32_0, %c0_i32_1 : i32, i32, i32
  }
  func.func @transform_4(%arg0: i32) -> (i32, i32) {
    %c0_i32 = arith.constant 0 : i32
    %c0_i32_0 = arith.constant 0 : i32
    %c0_i32_1 = arith.constant 0 : i32
    return %c0_i32, %c0_i32_0 : i32, i32
  }
  func.func @transform_5(%arg0: i32) -> (i32, i32) {
    %c0_i32 = arith.constant 0 : i32
    %c0_i32_0 = arith.constant 0 : i32
    %c0_i32_1 = arith.constant 0 : i32
    return %c0_i32, %c0_i32_0 : i32, i32
  }
  func.func @transform_6(%arg0: i32) -> (i32, i32) {
    %c0_i32 = arith.constant 0 : i32
    %c0_i32_0 = arith.constant 0 : i32
    %c0_i32_1 = arith.constant 0 : i32
    return %c0_i32, %c0_i32_0 : i32, i32
  }
  func.func @transform_7(%arg0: i32) -> (i32, i32) {
    %c0_i32 = arith.constant 0 : i32
    %c0_i32_0 = arith.constant 0 : i32
    %c0_i32_1 = arith.constant 0 : i32
    return %c0_i32, %c0_i32_0 : i32, i32
  }
}

</mosaic_0001>

<llo_original>
// kernel: face_regression_forward.1
$region0: #{face_regression_forward.1}
  #allocation0 [shape = 'u32[]', space=smem, size = 0x4, offset = 0x4, fixed_abs, tag = 'smem constant byte address 0x4 - core index']
  #allocation1 [shape = 'u32[72,128]{1,0:T(1,128)}', space=vmem, size = 0x9000, scoped, tag = 'internal scratch']
  #allocation2 [shape = 'f32[128,128]{1,0:T(8,128)}', space=vmem, size = 0x10000, scoped, tag = 'scratch operand']
  %s0 = inlined_call_operand.vmem [shape: bf16[128,256], index: 0, kind: input, shape index: {}]
  %s1 = inlined_call_operand.vmem [shape: bf16[256,128], index: 1, kind: input, shape index: {}]
  %s2 = inlined_call_operand.vmem [shape: f32[1,128], index: 2, kind: input, shape index: {}]
  %s3 = inlined_call_operand.vmem [shape: bf16[16,128,256], index: 3, kind: input, shape index: {}]
  %s4 = inlined_call_operand.vmem [shape: f32[1,256], index: 4, kind: input, shape index: {}]
  %s5 = inlined_call_operand.vmem [shape: bf16[256,128], index: 5, kind: input, shape index: {}]
  %s6 = inlined_call_operand.vmem [shape: f32[1,128], index: 6, kind: input, shape index: {}]
  %s7 = inlined_call_operand.vmem [shape: f32[8,128], index: 7, kind: output, shape index: {}]
  %s8 = sld [smem:[#allocation0]]
  $region38: #{face_regression_forward.1} parent=0
    _
  %s10 = ssub.s32 1, %s8
  %s11 = scalar_select 0, %s10, %s8
  // Predicated region
  $region2: #{face_regression_forward.1} parent=0 // pred_check
    _
  $region3: #{face_regression_forward.1} parent=0 // pred_check_branch
    %13 = sbr.rel (0) target = $region5
  $region4: #{face_regression_forward.1} parent=0 // pred_region
    _
  $region5: #{face_regression_forward.1} parent=0 // pred_fallthru
    _
  // Predicated region
  $region6: #{face_regression_forward.1} parent=0 // pred_check
    _
  $region7: #{face_regression_forward.1} parent=0 // pred_check_branch
    %15 = sbr.rel (0) target = $region9
  $region8: #{face_regression_forward.1} parent=0 // pred_region
    _
  $region9: #{face_regression_forward.1} parent=0 // pred_fallthru
    _
  // Predicated region
  $region10: #{face_regression_forward.1} parent=0 // pred_check
    _
  $region11: #{face_regression_forward.1} parent=0 // pred_check_branch
    %17 = sbr.rel (0) target = $region13
  $region12: #{face_regression_forward.1} parent=0 // pred_region
    _
  $region13: #{face_regression_forward.1} parent=0 // pred_fallthru
    _
  // Predicated region
  $region14: #{face_regression_forward.1} parent=0 // pred_check
    _
  $region15: #{face_regression_forward.1} parent=0 // pred_check_branch
    %19 = sbr.rel (0) target = $region17
  $region16: #{face_regression_forward.1} parent=0 // pred_region
    _
  $region17: #{face_regression_forward.1} parent=0 // pred_fallthru
    _
  // Predicated region
  $region18: #{face_regression_forward.1} parent=0 // pred_check
    _
  $region19: #{face_regression_forward.1} parent=0 // pred_check_branch
    %21 = sbr.rel (0) target = $region21
  $region20: #{face_regression_forward.1} parent=0 // pred_region
    _
  $region21: #{face_regression_forward.1} parent=0 // pred_fallthru
    _
  // Predicated region
  $region22: #{face_regression_forward.1} parent=0 // pred_check
    _
  $region23: #{face_regression_forward.1} parent=0 // pred_check_branch
    %23 = sbr.rel (0) target = $region25
  $region24: #{face_regression_forward.1} parent=0 // pred_region
    _
  $region25: #{face_regression_forward.1} parent=0 // pred_fallthru
    _
  // Predicated region
  $region26: #{face_regression_forward.1} parent=0 // pred_check
    _
  $region27: #{face_regression_forward.1} parent=0 // pred_check_branch
    %25 = sbr.rel (0) target = $region29
  $region28: #{face_regression_forward.1} parent=0 // pred_region
    _
  $region29: #{face_regression_forward.1} parent=0 // pred_fallthru
    _
  %v26 = vld [vmem:[%s0] sm:$0xff]
  %v27 = vld [vmem:[%s0 + $0x8] sm:$0xff]
  %v28 = vld [vmem:[%s0 + $0x10] sm:$0xff]
  %v29 = vld [vmem:[%s0 + $0x18] sm:$0xff]
  %v30 = vld [vmem:[%s0 + $0x20] sm:$0xff]
  %v31 = vld [vmem:[%s0 + $0x28] sm:$0xff]
  %v32 = vld [vmem:[%s0 + $0x30] sm:$0xff]
  %v33 = vld [vmem:[%s0 + $0x38] sm:$0xff]
  %v34 = vld [vmem:[%s0 + $0x40] sm:$0xff]
  %v35 = vld [vmem:[%s0 + $0x48] sm:$0xff]
  %v36 = vld [vmem:[%s0 + $0x50] sm:$0xff]
  %v37 = vld [vmem:[%s0 + $0x58] sm:$0xff]
  %v38 = vld [vmem:[%s0 + $0x60] sm:$0xff]
  %v39 = vld [vmem:[%s0 + $0x68] sm:$0xff]
  %v40 = vld [vmem:[%s0 + $0x70] sm:$0xff]
  %v41 = vld [vmem:[%s0 + $0x78] sm:$0xff]
  %v42 = vld [vmem:[%s1] sm:$0xf]
  %v43 = vld [vmem:[%s1 + $0x4] sm:$0xf]
  %v44 = vld [vmem:[%s1 + $0x8] sm:$0xf]
  %v45 = vld [vmem:[%s1 + $0xc] sm:$0xf]
  %v46 = vld [vmem:[%s1 + $0x10] sm:$0xf]
  %v47 = vld [vmem:[%s1 + $0x14] sm:$0xf]
  %v48 = vld [vmem:[%s1 + $0x18] sm:$0xf]
  %v49 = vld [vmem:[%s1 + $0x1c] sm:$0xf]
  %v50 = vld [vmem:[%s1 + $0x20] sm:$0xf]
  %v51 = vld [vmem:[%s1 + $0x24] sm:$0xf]
  %v52 = vld [vmem:[%s1 + $0x28] sm:$0xf]
  %v53 = vld [vmem:[%s1 + $0x2c] sm:$0xf]
  %v54 = vld [vmem:[%s1 + $0x30] sm:$0xf]
  %v55 = vld [vmem:[%s1 + $0x34] sm:$0xf]
  %v56 = vld [vmem:[%s1 + $0x38] sm:$0xf]
  %v57 = vld [vmem:[%s1 + $0x3c] sm:$0xf]
  %v58 = vld [vmem:[%s1 + $0x40] sm:$0xf]
  %v59 = vld [vmem:[%s1 + $0x44] sm:$0xf]
  %v60 = vld [vmem:[%s1 + $0x48] sm:$0xf]
  %v61 = vld [vmem:[%s1 + $0x4c] sm:$0xf]
  %v62 = vld [vmem:[%s1 + $0x50] sm:$0xf]
  %v63 = vld [vmem:[%s1 + $0x54] sm:$0xf]
  %v64 = vld [vmem:[%s1 + $0x58] sm:$0xf]
  %v65 = vld [vmem:[%s1 + $0x5c] sm:$0xf]
  %v66 = vld [vmem:[%s1 + $0x60] sm:$0xf]
  %v67 = vld [vmem:[%s1 + $0x64] sm:$0xf]
  %v68 = vld [vmem:[%s1 + $0x68] sm:$0xf]
  %v69 = vld [vmem:[%s1 + $0x6c] sm:$0xf]
  %v70 = vld [vmem:[%s1 + $0x70] sm:$0xf]
  %v71 = vld [vmem:[%s1 + $0x74] sm:$0xf]
  %v72 = vld [vmem:[%s1 + $0x78] sm:$0xf]
  %v73 = vld [vmem:[%s1 + $0x7c] sm:$0xf]
  %v74 = vld [vmem:[%s2] sm:$0x1]
  %v76 = vperm.slane %v74, 0
  %v94 = vunpack.c.l.b16 %v26
  %v95 = vunpack.c.h.b16 %v26
  %v96 = vunpack.c.l.b16 %v27
  %v97 = vunpack.c.h.b16 %v27
  %v98 = vunpack.c.l.b16 %v28
  %v99 = vunpack.c.h.b16 %v28
  %v100 = vunpack.c.l.b16 %v29
  %v101 = vunpack.c.h.b16 %v29
  %v102 = vunpack.c.l.b16 %v30
  %v103 = vunpack.c.h.b16 %v30
  %v104 = vunpack.c.l.b16 %v31
  %v105 = vunpack.c.h.b16 %v31
  %v106 = vunpack.c.l.b16 %v32
  %v107 = vunpack.c.h.b16 %v32
  %v108 = vunpack.c.l.b16 %v33
  %v109 = vunpack.c.h.b16 %v33
  %v110 = vunpack.c.l.b16 %v34
  %v111 = vunpack.c.h.b16 %v34
  %v112 = vunpack.c.l.b16 %v35
  %v113 = vunpack.c.h.b16 %v35
  %v114 = vunpack.c.l.b16 %v36
  %v115 = vunpack.c.h.b16 %v36
  %v116 = vunpack.c.l.b16 %v37
  %v117 = vunpack.c.h.b16 %v37
  %v118 = vunpack.c.l.b16 %v38
  %v119 = vunpack.c.h.b16 %v38
  %v120 = vunpack.c.l.b16 %v39
  %v121 = vunpack.c.h.b16 %v39
  %v122 = vunpack.c.l.b16 %v40
  %v123 = vunpack.c.h.b16 %v40
  %v124 = vunpack.c.l.b16 %v41
  %v125 = vunpack.c.h.b16 %v41
  %v126 = vpack.c.b16 %v96, %v94
  %v127 = vpack.c.b16 %v97, %v95
  %v128 = vpack.c.b16 %v100, %v98
  %v129 = vpack.c.b16 %v101, %v99
  %v130 = vpack.c.b16 %v104, %v102
  %v131 = vpack.c.b16 %v105, %v103
  %v132 = vpack.c.b16 %v108, %v106
  %v133 = vpack.c.b16 %v109, %v107
  %v134 = vpack.c.b16 %v112, %v110
  %v135 = vpack.c.b16 %v113, %v111
  %v136 = vpack.c.b16 %v116, %v114
  %v137 = vpack.c.b16 %v117, %v115
  %v138 = vpack.c.b16 %v120, %v118
  %v139 = vpack.c.b16 %v121, %v119
  %v140 = vpack.c.b16 %v124, %v122
  %v141 = vpack.c.b16 %v125, %v123
  %v190 = vunpack.c.l.b16 %v42
  %v191 = vunpack.c.l.b16 %v43
  %v192 = vunpack.c.l.b16 %v44
  %v193 = vunpack.c.l.b16 %v45
  %v194 = vunpack.c.l.b16 %v46
  %v195 = vunpack.c.l.b16 %v47
  %v196 = vunpack.c.l.b16 %v48
  %v197 = vunpack.c.l.b16 %v49
  %v198 = vunpack.c.l.b16 %v50
  %v199 = vunpack.c.l.b16 %v51
  %v200 = vunpack.c.l.b16 %v52
  %v201 = vunpack.c.l.b16 %v53
  %v202 = vunpack.c.l.b16 %v54
  %v203 = vunpack.c.l.b16 %v55
  %v204 = vunpack.c.l.b16 %v56
  %v205 = vunpack.c.l.b16 %v57
  %v206 = vunpack.c.l.b16 %v58
  %v207 = vunpack.c.l.b16 %v59
  %v208 = vunpack.c.l.b16 %v60
  %v209 = vunpack.c.l.b16 %v61
  %v210 = vunpack.c.l.b16 %v62
  %v211 = vunpack.c.l.b16 %v63
  %v212 = vunpack.c.l.b16 %v64
  %v213 = vunpack.c.l.b16 %v65
  %v214 = vunpack.c.l.b16 %v66
  %v215 = vunpack.c.l.b16 %v67
  %v216 = vunpack.c.l.b16 %v68
  %v217 = vunpack.c.l.b16 %v69
  %v218 = vunpack.c.l.b16 %v70
  %v219 = vunpack.c.l.b16 %v71
  %v220 = vunpack.c.l.b16 %v72
  %v221 = vunpack.c.l.b16 %v73
  %v222 = vpack.c.b16 %v191, %v190
  %v223 = vpack.c.b16 %v193, %v192
  %v224 = vpack.c.b16 %v195, %v194
  %v225 = vpack.c.b16 %v197, %v196
  %v226 = vpack.c.b16 %v199, %v198
  %v227 = vpack.c.b16 %v201, %v200
  %v228 = vpack.c.b16 %v203, %v202
  %v229 = vpack.c.b16 %v205, %v204
  %v230 = vpack.c.b16 %v207, %v206
  %v231 = vpack.c.b16 %v209, %v208
  %v232 = vpack.c.b16 %v211, %v210
  %v233 = vpack.c.b16 %v213, %v212
  %v234 = vpack.c.b16 %v215, %v214
  %v235 = vpack.c.b16 %v217, %v216
  %v236 = vpack.c.b16 %v219, %v218
  %v237 = vpack.c.b16 %v221, %v220
  %254 = vmatpush.bf16.msra.mxu0 %v229
  %255 = vmatpush.bf16.msra.mxu0 %v228
  %256 = vmatpush.bf16.msra.mxu0 %v227
  %257 = vmatpush.bf16.msra.mxu0 %v226
  %258 = vmatpush.bf16.msra.mxu0 %v225
  %259 = vmatpush.bf16.msra.mxu0 %v224
  %260 = vmatpush.bf16.msra.mxu0 %v223
  %261 = vmatpush.bf16.msra.mxu0 %v222
  %262 = vmatmul.bf16.gmra.mxu0 %v126
  %v263 = vpop.f32.mrf.mxu0
  %v264 = vadd.f32 %v76, %v263
  %v265 = vpop.f32.mrf.mxu0
  %v266 = vadd.f32 %v76, %v265
  %267 = vmatmul.bf16.gmra.mxu0 %v128
  %v268 = vpop.f32.mrf.mxu0
  %v269 = vadd.f32 %v76, %v268
  %v270 = vpop.f32.mrf.mxu0
  %v271 = vadd.f32 %v76, %v270
  %272 = vmatmul.bf16.gmra.mxu0 %v130
  %v273 = vpop.f32.mrf.mxu0
  %v274 = vadd.f32 %v76, %v273
  %v275 = vpop.f32.mrf.mxu0
  %v276 = vadd.f32 %v76, %v275
  %277 = vmatmul.bf16.gmra.mxu0 %v132
  %v278 = vpop.f32.mrf.mxu0
  %v279 = vadd.f32 %v76, %v278
  %v280 = vpop.f32.mrf.mxu0
  %v281 = vadd.f32 %v76, %v280
  %282 = vmatmul.bf16.gmra.mxu0 %v134
  %v283 = vpop.f32.mrf.mxu0
  %v284 = vadd.f32 %v76, %v283
  %v285 = vpop.f32.mrf.mxu0
  %v286 = vadd.f32 %v76, %v285
  %287 = vmatmul.bf16.gmra.mxu0 %v136
  %v288 = vpop.f32.mrf.mxu0
  %v289 = vadd.f32 %v76, %v288
  %v290 = vpop.f32.mrf.mxu0
  %v291 = vadd.f32 %v76, %v290
  %292 = vmatmul.bf16.gmra.mxu0 %v138
  %v293 = vpop.f32.mrf.mxu0
  %v294 = vadd.f32 %v76, %v293
  %v295 = vpop.f32.mrf.mxu0
  %v296 = vadd.f32 %v76, %v295
  %297 = vmatmul.bf16.gmra.mxu0 %v140
  %v298 = vpop.f32.mrf.mxu0
  %v299 = vadd.f32 %v76, %v298
  %v300 = vpop.f32.mrf.mxu0
  %v301 = vadd.f32 %v76, %v300
  %302 = vdwg.mxu0
  %303 = vmatpush.bf16.msra.mxu0 %v237
  %304 = vmatpush.bf16.msra.mxu0 %v236
  %305 = vmatpush.bf16.msra.mxu0 %v235
  %306 = vmatpush.bf16.msra.mxu0 %v234
  %307 = vmatpush.bf16.msra.mxu0 %v233
  %308 = vmatpush.bf16.msra.mxu0 %v232
  %309 = vmatpush.bf16.msra.mxu0 %v231
  %310 = vmatpush.bf16.msra.mxu0 %v230
  %311 = vmatmul.bf16.gmra.mxu0 %v127
  %v312 = vpop.f32.mrf.mxu0
  %v313 = vadd.f32 %v264, %v312
  %v314 = vpop.f32.mrf.mxu0
  %v315 = vadd.f32 %v266, %v314
  %316 = vmatmul.bf16.gmra.mxu0 %v129
  %v317 = vpop.f32.mrf.mxu0
  %v318 = vadd.f32 %v269, %v317
  %v319 = vpop.f32.mrf.mxu0
  %v320 = vadd.f32 %v271, %v319
  %321 = vmatmul.bf16.gmra.mxu0 %v131
  %v322 = vpop.f32.mrf.mxu0
  %v323 = vadd.f32 %v274, %v322
  %v324 = vpop.f32.mrf.mxu0
  %v325 = vadd.f32 %v276, %v324
  %326 = vmatmul.bf16.gmra.mxu0 %v133
  %v327 = vpop.f32.mrf.mxu0
  %v328 = vadd.f32 %v279, %v327
  %v329 = vpop.f32.mrf.mxu0
  %v330 = vadd.f32 %v281, %v329
  %331 = vmatmul.bf16.gmra.mxu0 %v135
  %v332 = vpop.f32.mrf.mxu0
  %v333 = vadd.f32 %v284, %v332
  %v334 = vpop.f32.mrf.mxu0
  %v335 = vadd.f32 %v286, %v334
  %336 = vmatmul.bf16.gmra.mxu0 %v137
  %v337 = vpop.f32.mrf.mxu0
  %v338 = vadd.f32 %v289, %v337
  %v339 = vpop.f32.mrf.mxu0
  %v340 = vadd.f32 %v291, %v339
  %341 = vmatmul.bf16.gmra.mxu0 %v139
  %v342 = vpop.f32.mrf.mxu0
  %v343 = vadd.f32 %v294, %v342
  %v344 = vpop.f32.mrf.mxu0
  %v345 = vadd.f32 %v296, %v344
  %346 = vmatmul.bf16.gmra.mxu0 %v141
  %v347 = vpop.f32.mrf.mxu0
  %v348 = vadd.f32 %v299, %v347
  %v349 = vpop.f32.mrf.mxu0
  %v350 = vadd.f32 %v301, %v349
  %351 = vdwg.mxu0
  %v352 = vmax.f32 %v313, 0.0
  %v353 = vmax.f32 %v315, 0.0
  %v354 = vmax.f32 %v318, 0.0
  %v355 = vmax.f32 %v320, 0.0
  %v356 = vmax.f32 %v323, 0.0
  %v357 = vmax.f32 %v325, 0.0
  %v358 = vmax.f32 %v328, 0.0
  %v359 = vmax.f32 %v330, 0.0
  %v360 = vmax.f32 %v333, 0.0
  %v361 = vmax.f32 %v335, 0.0
  %v362 = vmax.f32 %v338, 0.0
  %v363 = vmax.f32 %v340, 0.0
  %v364 = vmax.f32 %v343, 0.0
  %v365 = vmax.f32 %v345, 0.0
  %v366 = vmax.f32 %v348, 0.0
  %v367 = vmax.f32 %v350, 0.0
  %368 = vst [vmem:[#allocation2] sm:$0xff] %v352
  %369 = vst [vmem:[#allocation2 + $0x8] sm:$0xff] %v353
  %370 = vst [vmem:[#allocation2 + $0x10] sm:$0xff] %v354
  %371 = vst [vmem:[#allocation2 + $0x18] sm:$0xff] %v355
  %372 = vst [vmem:[#allocation2 + $0x20] sm:$0xff] %v356
  %373 = vst [vmem:[#allocation2 + $0x28] sm:$0xff] %v357
  %374 = vst [vmem:[#allocation2 + $0x30] sm:$0xff] %v358
  %375 = vst [vmem:[#allocation2 + $0x38] sm:$0xff] %v359
  %376 = vst [vmem:[#allocation2 + $0x40] sm:$0xff] %v360
  %377 = vst [vmem:[#allocation2 + $0x48] sm:$0xff] %v361
  %378 = vst [vmem:[#allocation2 + $0x50] sm:$0xff] %v362
  %379 = vst [vmem:[#allocation2 + $0x58] sm:$0xff] %v363
  %380 = vst [vmem:[#allocation2 + $0x60] sm:$0xff] %v364
  %381 = vst [vmem:[#allocation2 + $0x68] sm:$0xff] %v365
  %382 = vst [vmem:[#allocation2 + $0x70] sm:$0xff] %v366
  %383 = vst [vmem:[#allocation2 + $0x78] sm:$0xff] %v367
  %v384 = vld [vmem:[#allocation2] sm:$0xff]
  %v385 = vpack.c.bf16 %v384, %v384
  %v386 = vld [vmem:[%s3] sm:$0xff]
  %v387 = vld [vmem:[%s3 + $0x8] sm:$0xff]
  %v388 = vld [vmem:[%s3 + $0x10] sm:$0xff]
  %v389 = vld [vmem:[%s3 + $0x18] sm:$0xff]
  %v390 = vld [vmem:[%s3 + $0x20] sm:$0xff]
  %v391 = vld [vmem:[%s3 + $0x28] sm:$0xff]
  %v392 = vld [vmem:[%s3 + $0x30] sm:$0xff]
  %v393 = vld [vmem:[%s3 + $0x38] sm:$0xff]
  %v394 = vld [vmem:[%s3 + $0x40] sm:$0xff]
  %v395 = vld [vmem:[%s3 + $0x48] sm:$0xff]
  %v396 = vld [vmem:[%s3 + $0x50] sm:$0xff]
  %v397 = vld [vmem:[%s3 + $0x58] sm:$0xff]
  %v398 = vld [vmem:[%s3 + $0x60] sm:$0xff]
  %v399 = vld [vmem:[%s3 + $0x68] sm:$0xff]
  %v400 = vld [vmem:[%s3 + $0x70] sm:$0xff]
  %v401 = vld [vmem:[%s3 + $0x78] sm:$0xff]
  %v402 = vld [vmem:[#allocation2 + $0x8] sm:$0xff]
  %v403 = vpack.c.bf16 %v402, %v402
  %s404 = scalar_lea.vmem %s3, 128
  %v405 = vld [vmem:[%s404] sm:$0xff]
  %v406 = vld [vmem:[%s404 + $0x8] sm:$0xff]
  %v407 = vld [vmem:[%s404 + $0x10] sm:$0xff]
  %v408 = vld [vmem:[%s404 + $0x18] sm:$0xff]
  %v409 = vld [vmem:[%s404 + $0x20] sm:$0xff]
  %v410 = vld [vmem:[%s404 + $0x28] sm:$0xff]
  %v411 = vld [vmem:[%s404 + $0x30] sm:$0xff]
  %v412 = vld [vmem:[%s404 + $0x38] sm:$0xff]
  %v413 = vld [vmem:[%s404 + $0x40] sm:$0xff]
  %v414 = vld [vmem:[%s404 + $0x48] sm:$0xff]
  %v415 = vld [vmem:[%s404 + $0x50] sm:$0xff]
  %v416 = vld [vmem:[%s404 + $0x58] sm:$0xff]
  %v417 = vld [vmem:[%s404 + $0x60] sm:$0xff]
  %v418 = vld [vmem:[%s404 + $0x68] sm:$0xff]
  %v419 = vld [vmem:[%s404 + $0x70] sm:$0xff]
  %v420 = vld [vmem:[%s404 + $0x78] sm:$0xff]
  %v437 = vunpack.c.l.b16 %v405
  %v438 = vunpack.c.h.b16 %v405
  %v439 = vunpack.c.l.b16 %v406
  %v440 = vunpack.c.h.b16 %v406
  %v441 = vunpack.c.l.b16 %v407
  %v442 = vunpack.c.h.b16 %v407
  %v443 = vunpack.c.l.b16 %v408
  %v444 = vunpack.c.h.b16 %v408
  %v445 = vunpack.c.l.b16 %v409
  %v446 = vunpack.c.h.b16 %v409
  %v447 = vunpack.c.l.b16 %v410
  %v448 = vunpack.c.h.b16 %v410
  %v449 = vunpack.c.l.b16 %v411
  %v450 = vunpack.c.h.b16 %v411
  %v451 = vunpack.c.l.b16 %v412
  %v452 = vunpack.c.h.b16 %v412
  %v453 = vunpack.c.l.b16 %v413
  %v454 = vunpack.c.h.b16 %v413
  %v455 = vunpack.c.l.b16 %v414
  %v456 = vunpack.c.h.b16 %v414
  %v457 = vunpack.c.l.b16 %v415
  %v458 = vunpack.c.h.b16 %v415
  %v459 = vunpack.c.l.b16 %v416
  %v460 = vunpack.c.h.b16 %v416
  %v461 = vunpack.c.l.b16 %v417
  %v462 = vunpack.c.h.b16 %v417
  %v463 = vunpack.c.l.b16 %v418
  %v464 = vunpack.c.h.b16 %v418
  %v465 = vunpack.c.l.b16 %v419
  %v466 = vunpack.c.h.b16 %v419
  %v467 = vunpack.c.l.b16 %v420
  %v468 = vunpack.c.h.b16 %v420
  %v469 = vpack.c.b16 %v439, %v437
  %v470 = vpack.c.b16 %v440, %v438
  %v471 = vpack.c.b16 %v443, %v441
  %v472 = vpack.c.b16 %v444, %v442
  %v473 = vpack.c.b16 %v447, %v445
  %v474 = vpack.c.b16 %v448, %v446
  %v475 = vpack.c.b16 %v451, %v449
  %v476 = vpack.c.b16 %v452, %v450
  %v477 = vpack.c.b16 %v455, %v453
  %v478 = vpack.c.b16 %v456, %v454
  %v479 = vpack.c.b16 %v459, %v457
  %v480 = vpack.c.b16 %v460, %v458
  %v481 = vpack.c.b16 %v463, %v461
  %v482 = vpack.c.b16 %v464, %v462
  %v483 = vpack.c.b16 %v467, %v465
  %v484 = vpack.c.b16 %v468, %v466
  %501 = vmatpush.bf16.msra.mxu0 %v483
  %502 = vmatpush.bf16.msra.mxu0 %v481
  %503 = vmatpush.bf16.msra.mxu0 %v479
  %504 = vmatpush.bf16.msra.mxu0 %v477
  %505 = vmatpush.bf16.msra.mxu0 %v475
  %506 = vmatpush.bf16.msra.mxu0 %v473
  %507 = vmatpush.bf16.msra.mxu0 %v471
  %508 = vmatpush.bf16.msra.mxu0 %v469
  %509 = vmatmul.bf16.gmra.mxu0 %v403
  %v510 = vpop.f32.mrf.mxu0
  %v511 = vadd.f32 0.0, %v510
  %v512 = vpop.f32.mrf.mxu0
  %513 = vdwg.mxu0
  %514 = vmatpush.bf16.msra.mxu0 %v484
  %515 = vmatpush.bf16.msra.mxu0 %v482
  %516 = vmatpush.bf16.msra.mxu0 %v480
  %517 = vmatpush.bf16.msra.mxu0 %v478
  %518 = vmatpush.bf16.msra.mxu0 %v476
  %519 = vmatpush.bf16.msra.mxu0 %v474
  %520 = vmatpush.bf16.msra.mxu0 %v472
  %521 = vmatpush.bf16.msra.mxu0 %v470
  %522 = vmatmul.bf16.gmra.mxu0 %v403
  %v523 = vpop.f32.mrf.mxu0
  %v524 = vadd.f32 0.0, %v523
  %v525 = vpop.f32.mrf.mxu0
  %526 = vdwg.mxu0
  %v543 = vunpack.c.l.b16 %v386
  %v544 = vunpack.c.h.b16 %v386
  %v545 = vunpack.c.l.b16 %v387
  %v546 = vunpack.c.h.b16 %v387
  %v547 = vunpack.c.l.b16 %v388
  %v548 = vunpack.c.h.b16 %v388
  %v549 = vunpack.c.l.b16 %v389
  %v550 = vunpack.c.h.b16 %v389
  %v551 = vunpack.c.l.b16 %v390
  %v552 = vunpack.c.h.b16 %v390
  %v553 = vunpack.c.l.b16 %v391
  %v554 = vunpack.c.h.b16 %v391
  %v555 = vunpack.c.l.b16 %v392
  %v556 = vunpack.c.h.b16 %v392
  %v557 = vunpack.c.l.b16 %v393
  %v558 = vunpack.c.h.b16 %v393
  %v559 = vunpack.c.l.b16 %v394
  %v560 = vunpack.c.h.b16 %v394
  %v561 = vunpack.c.l.b16 %v395
  %v562 = vunpack.c.h.b16 %v395
  %v563 = vunpack.c.l.b16 %v396
  %v564 = vunpack.c.h.b16 %v396
  %v565 = vunpack.c.l.b16 %v397
  %v566 = vunpack.c.h.b16 %v397
  %v567 = vunpack.c.l.b16 %v398
  %v568 = vunpack.c.h.b16 %v398
  %v569 = vunpack.c.l.b16 %v399
  %v570 = vunpack.c.h.b16 %v399
  %v571 = vunpack.c.l.b16 %v400
  %v572 = vunpack.c.h.b16 %v400
  %v573 = vunpack.c.l.b16 %v401
  %v574 = vunpack.c.h.b16 %v401
  %v575 = vpack.c.b16 %v545, %v543
  %v576 = vpack.c.b16 %v546, %v544
  %v577 = vpack.c.b16 %v549, %v547
  %v578 = vpack.c.b16 %v550, %v548
  %v579 = vpack.c.b16 %v553, %v551
  %v580 = vpack.c.b16 %v554, %v552
  %v581 = vpack.c.b16 %v557, %v555
  %v582 = vpack.c.b16 %v558, %v556
  %v583 = vpack.c.b16 %v561, %v559
  %v584 = vpack.c.b16 %v562, %v560
  %v585 = vpack.c.b16 %v565, %v563
  %v586 = vpack.c.b16 %v566, %v564
  %v587 = vpack.c.b16 %v569, %v567
  %v588 = vpack.c.b16 %v570, %v568
  %v589 = vpack.c.b16 %v573, %v571
  %v590 = vpack.c.b16 %v574, %v572
  %607 = vmatpush.bf16.msra.mxu0 %v589
  %608 = vmatpush.bf16.msra.mxu0 %v587
  %609 = vmatpush.bf16.msra.mxu0 %v585
  %610 = vmatpush.bf16.msra.mxu0 %v583
  %611 = vmatpush.bf16.msra.mxu0 %v581
  %612 = vmatpush.bf16.msra.mxu0 %v579
  %613 = vmatpush.bf16.msra.mxu0 %v577
  %614 = vmatpush.bf16.msra.mxu0 %v575
  %615 = vmatmul.bf16.gmra.mxu0 %v385
  %v616 = vpop.f32.mrf.mxu0
  %v617 = vadd.f32 %v511, %v616
  %v618 = vpop.f32.mrf.mxu0
  %619 = vdwg.mxu0
  %620 = vmatpush.bf16.msra.mxu0 %v590
  %621 = vmatpush.bf16.msra.mxu0 %v588
  %622 = vmatpush.bf16.msra.mxu0 %v586
  %623 = vmatpush.bf16.msra.mxu0 %v584
  %624 = vmatpush.bf16.msra.mxu0 %v582
  %625 = vmatpush.bf16.msra.mxu0 %v580
  %626 = vmatpush.bf16.msra.mxu0 %v578
  %627 = vmatpush.bf16.msra.mxu0 %v576
  %628 = vmatmul.bf16.gmra.mxu0 %v385
  %v629 = vpop.f32.mrf.mxu0
  %v630 = vadd.f32 %v524, %v629
  %v631 = vpop.f32.mrf.mxu0
  %632 = vdwg.mxu0
  %v633 = vld [vmem:[#allocation2 + $0x10] sm:$0xff]
  %v634 = vpack.c.bf16 %v633, %v633
  %s635 = scalar_lea.vmem %s3, 256
  %v636 = vld [vmem:[%s635] sm:$0xff]
  %v637 = vld [vmem:[%s635 + $0x8] sm:$0xff]
  %v638 = vld [vmem:[%s635 + $0x10] sm:$0xff]
  %v639 = vld [vmem:[%s635 + $0x18] sm:$0xff]
  %v640 = vld [vmem:[%s635 + $0x20] sm:$0xff]
  %v641 = vld [vmem:[%s635 + $0x28] sm:$0xff]
  %v642 = vld [vmem:[%s635 + $0x30] sm:$0xff]
  %v643 = vld [vmem:[%s635 + $0x38] sm:$0xff]
  %v644 = vld [vmem:[%s635 + $0x40] sm:$0xff]
  %v645 = vld [vmem:[%s635 + $0x48] sm:$0xff]
  %v646 = vld [vmem:[%s635 + $0x50] sm:$0xff]
  %v647 = vld [vmem:[%s635 + $0x58] sm:$0xff]
  %v648 = vld [vmem:[%s635 + $0x60] sm:$0xff]
  %v649 = vld [vmem:[%s635 + $0x68] sm:$0xff]
  %v650 = vld [vmem:[%s635 + $0x70] sm:$0xff]
  %v651 = vld [vmem:[%s635 + $0x78] sm:$0xff]
  %v668 = vunpack.c.l.b16 %v636
  %v669 = vunpack.c.h.b16 %v636
  %v670 = vunpack.c.l.b16 %v637
  %v671 = vunpack.c.h.b16 %v637
  %v672 = vunpack.c.l.b16 %v638
  %v673 = vunpack.c.h.b16 %v638
  %v674 = vunpack.c.l.b16 %v639
  %v675 = vunpack.c.h.b16 %v639
  %v676 = vunpack.c.l.b16 %v640
  %v677 = vunpack.c.h.b16 %v640
  %v678 = vunpack.c.l.b16 %v641
  %v679 = vunpack.c.h.b16 %v641
  %v680 = vunpack.c.l.b16 %v642
  %v681 = vunpack.c.h.b16 %v642
  %v682 = vunpack.c.l.b16 %v643
  %v683 = vunpack.c.h.b16 %v643
  %v684 = vunpack.c.l.b16 %v644
  %v685 = vunpack.c.h.b16 %v644
  %v686 = vunpack.c.l.b16 %v645
  %v687 = vunpack.c.h.b16 %v645
  %v688 = vunpack.c.l.b16 %v646
  %v689 = vunpack.c.h.b16 %v646
  %v690 = vunpack.c.l.b16 %v647
  %v691 = vunpack.c.h.b16 %v647
  %v692 = vunpack.c.l.b16 %v648
  %v693 = vunpack.c.h.b16 %v648
  %v694 = vunpack.c.l.b16 %v649
  %v695 = vunpack.c.h.b16 %v649
  %v696 = vunpack.c.l.b16 %v650
  %v697 = vunpack.c.h.b16 %v650
  %v698 = vunpack.c.l.b16 %v651
  %v699 = vunpack.c.h.b16 %v651
  %v700 = vpack.c.b16 %v670, %v668
  %v701 = vpack.c.b16 %v671, %v669
  %v702 = vpack.c.b16 %v674, %v672
  %v703 = vpack.c.b16 %v675, %v673
  %v704 = vpack.c.b16 %v678, %v676
  %v705 = vpack.c.b16 %v679, %v677
  %v706 = vpack.c.b16 %v682, %v680
  %v707 = vpack.c.b16 %v683, %v681
  %v708 = vpack.c.b16 %v686, %v684
  %v709 = vpack.c.b16 %v687, %v685
  %v710 = vpack.c.b16 %v690, %v688
  %v711 = vpack.c.b16 %v691, %v689
  %v712 = vpack.c.b16 %v694, %v692
  %v713 = vpack.c.b16 %v695, %v693
  %v714 = vpack.c.b16 %v698, %v696
  %v715 = vpack.c.b16 %v699, %v697
  %732 = vmatpush.bf16.msra.mxu0 %v714
  %733 = vmatpush.bf16.msra.mxu0 %v712
  %734 = vmatpush.bf16.msra.mxu0 %v710
  %735 = vmatpush.bf16.msra.mxu0 %v708
  %736 = vmatpush.bf16.msra.mxu0 %v706
  %737 = vmatpush.bf16.msra.mxu0 %v704
  %738 = vmatpush.bf16.msra.mxu0 %v702
  %739 = vmatpush.bf16.msra.mxu0 %v700
  %740 = vmatmul.bf16.gmra.mxu0 %v634
  %v741 = vpop.f32.mrf.mxu0
  %v742 = vadd.f32 0.0, %v741
  %v743 = vpop.f32.mrf.mxu0
  %744 = vdwg.mxu0
  %745 = vmatpush.bf16.msra.mxu0 %v715
  %746 = vmatpush.bf16.msra.mxu0 %v713
  %747 = vmatpush.bf16.msra.mxu0 %v711
  %748 = vmatpush.bf16.msra.mxu0 %v709
  %749 = vmatpush.bf16.msra.mxu0 %v707
  %750 = vmatpush.bf16.msra.mxu0 %v705
  %751 = vmatpush.bf16.msra.mxu0 %v703
  %752 = vmatpush.bf16.msra.mxu0 %v701
  %753 = vmatmul.bf16.gmra.mxu0 %v634
  %v754 = vpop.f32.mrf.mxu0
  %v755 = vadd.f32 0.0, %v754
  %v756 = vpop.f32.mrf.mxu0
  %757 = vdwg.mxu0
  %v758 = vadd.f32 %v617, %v742
  %v759 = vadd.f32 %v630, %v755
  %v760 = vld [vmem:[#allocation2 + $0x18] sm:$0xff]
  %v761 = vpack.c.bf16 %v760, %v760
  %s762 = scalar_lea.vmem %s3, 384
  %v763 = vld [vmem:[%s762] sm:$0xff]
  %v764 = vld [vmem:[%s762 + $0x8] sm:$0xff]
  %v765 = vld [vmem:[%s762 + $0x10] sm:$0xff]
  %v766 = vld [vmem:[%s762 + $0x18] sm:$0xff]
  %v767 = vld [vmem:[%s762 + $0x20] sm:$0xff]
  %v768 = vld [vmem:[%s762 + $0x28] sm:$0xff]
  %v769 = vld [vmem:[%s762 + $0x30] sm:$0xff]
  %v770 = vld [vmem:[%s762 + $0x38] sm:$0xff]
  %v771 = vld [vmem:[%s762 + $0x40] sm:$0xff]
  %v772 = vld [vmem:[%s762 + $0x48] sm:$0xff]
  %v773 = vld [vmem:[%s762 + $0x50] sm:$0xff]
  %v774 = vld [vmem:[%s762 + $0x58] sm:$0xff]
  %v775 = vld [vmem:[%s762 + $0x60] sm:$0xff]
  %v776 = vld [vmem:[%s762 + $0x68] sm:$0xff]
  %v777 = vld [vmem:[%s762 + $0x70] sm:$0xff]
  %v778 = vld [vmem:[%s762 + $0x78] sm:$0xff]
  %v795 = vunpack.c.l.b16 %v763
  %v796 = vunpack.c.h.b16 %v763
  %v797 = vunpack.c.l.b16 %v764
  %v798 = vunpack.c.h.b16 %v764
  %v799 = vunpack.c.l.b16 %v765
  %v800 = vunpack.c.h.b16 %v765
  %v801 = vunpack.c.l.b16 %v766
  %v802 = vunpack.c.h.b16 %v766
  %v803 = vunpack.c.l.b16 %v767
  %v804 = vunpack.c.h.b16 %v767
  %v805 = vunpack.c.l.b16 %v768
  %v806 = vunpack.c.h.b16 %v768
  %v807 = vunpack.c.l.b16 %v769
  %v808 = vunpack.c.h.b16 %v769
  %v809 = vunpack.c.l.b16 %v770
  %v810 = vunpack.c.h.b16 %v770
  %v811 = vunpack.c.l.b16 %v771
  %v812 = vunpack.c.h.b16 %v771
  %v813 = vunpack.c.l.b16 %v772
  %v814 = vunpack.c.h.b16 %v772
  %v815 = vunpack.c.l.b16 %v773
  %v816 = vunpack.c.h.b16 %v773
  %v817 = vunpack.c.l.b16 %v774
  %v818 = vunpack.c.h.b16 %v774
  %v819 = vunpack.c.l.b16 %v775
  %v820 = vunpack.c.h.b16 %v775
  %v821 = vunpack.c.l.b16 %v776
  %v822 = vunpack.c.h.b16 %v776
  %v823 = vunpack.c.l.b16 %v777
  %v824 = vunpack.c.h.b16 %v777
  %v825 = vunpack.c.l.b16 %v778
  %v826 = vunpack.c.h.b16 %v778
  %v827 = vpack.c.b16 %v797, %v795
  %v828 = vpack.c.b16 %v798, %v796
  %v829 = vpack.c.b16 %v801, %v799
  %v830 = vpack.c.b16 %v802, %v800
  %v831 = vpack.c.b16 %v805, %v803
  %v832 = vpack.c.b16 %v806, %v804
  %v833 = vpack.c.b16 %v809, %v807
  %v834 = vpack.c.b16 %v810, %v808
  %v835 = vpack.c.b16 %v813, %v811
  %v836 = vpack.c.b16 %v814, %v812
  %v837 = vpack.c.b16 %v817, %v815
  %v838 = vpack.c.b16 %v818, %v816
  %v839 = vpack.c.b16 %v821, %v819
  %v840 = vpack.c.b16 %v822, %v820
  %v841 = vpack.c.b16 %v825, %v823
  %v842 = vpack.c.b16 %v826, %v824
  %859 = vmatpush.bf16.msra.mxu0 %v841
  %860 = vmatpush.bf16.msra.mxu0 %v839
  %861 = vmatpush.bf16.msra.mxu0 %v837
  %862 = vmatpush.bf16.msra.mxu0 %v835
  %863 = vmatpush.bf16.msra.mxu0 %v833
  %864 = vmatpush.bf16.msra.mxu0 %v831
  %865 = vmatpush.bf16.msra.mxu0 %v829
  %866 = vmatpush.bf16.msra.mxu0 %v827
  %867 = vmatmul.bf16.gmra.mxu0 %v761
  %v868 = vpop.f32.mrf.mxu0
  %v869 = vadd.f32 0.0, %v868
  %v870 = vpop.f32.mrf.mxu0
  %871 = vdwg.mxu0
  %872 = vmatpush.bf16.msra.mxu0 %v842
  %873 = vmatpush.bf16.msra.mxu0 %v840
  %874 = vmatpush.bf16.msra.mxu0 %v838
  %875 = vmatpush.bf16.msra.mxu0 %v836
  %876 = vmatpush.bf16.msra.mxu0 %v834
  %877 = vmatpush.bf16.msra.mxu0 %v832
  %878 = vmatpush.bf16.msra.mxu0 %v830
  %879 = vmatpush.bf16.msra.mxu0 %v828
  %880 = vmatmul.bf16.gmra.mxu0 %v761
  %v881 = vpop.f32.mrf.mxu0
  %v882 = vadd.f32 0.0, %v881
  %v883 = vpop.f32.mrf.mxu0
  %884 = vdwg.mxu0
  %v885 = vadd.f32 %v758, %v869
  %v886 = vadd.f32 %v759, %v882
  %v887 = vld [vmem:[#allocation2 + $0x20] sm:$0xff]
  %v888 = vpack.c.bf16 %v887, %v887
  %s889 = scalar_lea.vmem %s3, 512
  %v890 = vld [vmem:[%s889] sm:$0xff]
  %v891 = vld [vmem:[%s889 + $0x8] sm:$0xff]
  %v892 = vld [vmem:[%s889 + $0x10] sm:$0xff]
  %v893 = vld [vmem:[%s889 + $0x18] sm:$0xff]
  %v894 = vld [vmem:[%s889 + $0x20] sm:$0xff]
  %v895 = vld [vmem:[%s889 + $0x28] sm:$0xff]
  %v896 = vld [vmem:[%s889 + $0x30] sm:$0xff]
  %v897 = vld [vmem:[%s889 + $0x38] sm:$0xff]
  %v898 = vld [vmem:[%s889 + $0x40] sm:$0xff]
  %v899 = vld [vmem:[%s889 + $0x48] sm:$0xff]
  %v900 = vld [vmem:[%s889 + $0x50] sm:$0xff]
  %v901 = vld [vmem:[%s889 + $0x58] sm:$0xff]
  %v902 = vld [vmem:[%s889 + $0x60] sm:$0xff]
  %v903 = vld [vmem:[%s889 + $0x68] sm:$0xff]
  %v904 = vld [vmem:[%s889 + $0x70] sm:$0xff]
  %v905 = vld [vmem:[%s889 + $0x78] sm:$0xff]
  %v922 = vunpack.c.l.b16 %v890
  %v923 = vunpack.c.h.b16 %v890
  %v924 = vunpack.c.l.b16 %v891
  %v925 = vunpack.c.h.b16 %v891
  %v926 = vunpack.c.l.b16 %v892
  %v927 = vunpack.c.h.b16 %v892
  %v928 = vunpack.c.l.b16 %v893
  %v929 = vunpack.c.h.b16 %v893
  %v930 = vunpack.c.l.b16 %v894
  %v931 = vunpack.c.h.b16 %v894
  %v932 = vunpack.c.l.b16 %v895
  %v933 = vunpack.c.h.b16 %v895
  %v934 = vunpack.c.l.b16 %v896
  %v935 = vunpack.c.h.b16 %v896
  %v936 = vunpack.c.l.b16 %v897
  %v937 = vunpack.c.h.b16 %v897
  %v938 = vunpack.c.l.b16 %v898
  %v939 = vunpack.c.h.b16 %v898
  %v940 = vunpack.c.l.b16 %v899
  %v941 = vunpack.c.h.b16 %v899
  %v942 = vunpack.c.l.b16 %v900
  %v943 = vunpack.c.h.b16 %v900
  %v944 = vunpack.c.l.b16 %v901
  %v945 = vunpack.c.h.b16 %v901
  %v946 = vunpack.c.l.b16 %v902
  %v947 = vunpack.c.h.b16 %v902
  %v948 = vunpack.c.l.b16 %v903
  %v949 = vunpack.c.h.b16 %v903
  %v950 = vunpack.c.l.b16 %v904
  %v951 = vunpack.c.h.b16 %v904
  %v952 = vunpack.c.l.b16 %v905
  %v953 = vunpack.c.h.b16 %v905
  %v954 = vpack.c.b16 %v924, %v922
  %v955 = vpack.c.b16 %v925, %v923
  %v956 = vpack.c.b16 %v928, %v926
  %v957 = vpack.c.b16 %v929, %v927
  %v958 = vpack.c.b16 %v932, %v930
  %v959 = vpack.c.b16 %v933, %v931
  %v960 = vpack.c.b16 %v936, %v934
  %v961 = vpack.c.b16 %v937, %v935
  %v962 = vpack.c.b16 %v940, %v938
  %v963 = vpack.c.b16 %v941, %v939
  %v964 = vpack.c.b16 %v944, %v942
  %v965 = vpack.c.b16 %v945, %v943
  %v966 = vpack.c.b16 %v948, %v946
  %v967 = vpack.c.b16 %v949, %v947
  %v968 = vpack.c.b16 %v952, %v950
  %v969 = vpack.c.b16 %v953, %v951
  %986 = vmatpush.bf16.msra.mxu0 %v968
  %987 = vmatpush.bf16.msra.mxu0 %v966
  %988 = vmatpush.bf16.msra.mxu0 %v964
  %989 = vmatpush.bf16.msra.mxu0 %v962
  %990 = vmatpush.bf16.msra.mxu0 %v960
  %991 = vmatpush.bf16.msra.mxu0 %v958
  %992 = vmatpush.bf16.msra.mxu0 %v956
  %993 = vmatpush.bf16.msra.mxu0 %v954
  %994 = vmatmul.bf16.gmra.mxu0 %v888
  %v995 = vpop.f32.mrf.mxu0
  %v996 = vadd.f32 0.0, %v995
  %v997 = vpop.f32.mrf.mxu0
  %998 = vdwg.mxu0
  %999 = vmatpush.bf16.msra.mxu0 %v969
  %1000 = vmatpush.bf16.msra.mxu0 %v967
  %1001 = vmatpush.bf16.msra.mxu0 %v965
  %1002 = vmatpush.bf16.msra.mxu0 %v963
  %1003 = vmatpush.bf16.msra.mxu0 %v961
  %1004 = vmatpush.bf16.msra.mxu0 %v959
  %1005 = vmatpush.bf16.msra.mxu0 %v957
  %1006 = vmatpush.bf16.msra.mxu0 %v955
  %1007 = vmatmul.bf16.gmra.mxu0 %v888
  %v1008 = vpop.f32.mrf.mxu0
  %v1009 = vadd.f32 0.0, %v1008
  %v1010 = vpop.f32.mrf.mxu0
  %1011 = vdwg.mxu0
  %v1012 = vadd.f32 %v885, %v996
  %v1013 = vadd.f32 %v886, %v1009
  %v1014 = vld [vmem:[#allocation2 + $0x28] sm:$0xff]
  %v1015 = vpack.c.bf16 %v1014, %v1014
  %s1016 = scalar_lea.vmem %s3, 640
  %v1017 = vld [vmem:[%s1016] sm:$0xff]
  %v1018 = vld [vmem:[%s1016 + $0x8] sm:$0xff]
  %v1019 = vld [vmem:[%s1016 + $0x10] sm:$0xff]
  %v1020 = vld [vmem:[%s1016 + $0x18] sm:$0xff]
  %v1021 = vld [vmem:[%s1016 + $0x20] sm:$0xff]
  %v1022 = vld [vmem:[%s1016 + $0x28] sm:$0xff]
  %v1023 = vld [vmem:[%s1016 + $0x30] sm:$0xff]
  %v1024 = vld [vmem:[%s1016 + $0x38] sm:$0xff]
  %v1025 = vld [vmem:[%s1016 + $0x40] sm:$0xff]
  %v1026 = vld [vmem:[%s1016 + $0x48] sm:$0xff]
  %v1027 = vld [vmem:[%s1016 + $0x50] sm:$0xff]
  %v1028 = vld [vmem:[%s1016 + $0x58] sm:$0xff]
  %v1029 = vld [vmem:[%s1016 + $0x60] sm:$0xff]
  %v1030 = vld [vmem:[%s1016 + $0x68] sm:$0xff]
  %v1031 = vld [vmem:[%s1016 + $0x70] sm:$0xff]
  %v1032 = vld [vmem:[%s1016 + $0x78] sm:$0xff]
  %v1049 = vunpack.c.l.b16 %v1017
  %v1050 = vunpack.c.h.b16 %v1017
  %v1051 = vunpack.c.l.b16 %v1018
  %v1052 = vunpack.c.h.b16 %v1018
  %v1053 = vunpack.c.l.b16 %v1019
  %v1054 = vunpack.c.h.b16 %v1019
  %v1055 = vunpack.c.l.b16 %v1020
  %v1056 = vunpack.c.h.b16 %v1020
  %v1057 = vunpack.c.l.b16 %v1021
  %v1058 = vunpack.c.h.b16 %v1021
  %v1059 = vunpack.c.l.b16 %v1022
  %v1060 = vunpack.c.h.b16 %v1022
  %v1061 = vunpack.c.l.b16 %v1023
  %v1062 = vunpack.c.h.b16 %v1023
  %v1063 = vunpack.c.l.b16 %v1024
  %v1064 = vunpack.c.h.b16 %v1024
  %v1065 = vunpack.c.l.b16 %v1025
  %v1066 = vunpack.c.h.b16 %v1025
  %v1067 = vunpack.c.l.b16 %v1026
  %v1068 = vunpack.c.h.b16 %v1026
  %v1069 = vunpack.c.l.b16 %v1027
  %v1070 = vunpack.c.h.b16 %v1027
  %v1071 = vunpack.c.l.b16 %v1028
  %v1072 = vunpack.c.h.b16 %v1028
  %v1073 = vunpack.c.l.b16 %v1029
  %v1074 = vunpack.c.h.b16 %v1029
  %v1075 = vunpack.c.l.b16 %v1030
  %v1076 = vunpack.c.h.b16 %v1030
  %v1077 = vunpack.c.l.b16 %v1031
  %v1078 = vunpack.c.h.b16 %v1031
  %v1079 = vunpack.c.l.b16 %v1032
  %v1080 = vunpack.c.h.b16 %v1032
  %v1081 = vpack.c.b16 %v1051, %v1049
  %v1082 = vpack.c.b16 %v1052, %v1050
  %v1083 = vpack.c.b16 %v1055, %v1053
  %v1084 = vpack.c.b16 %v1056, %v1054
  %v1085 = vpack.c.b16 %v1059, %v1057
  %v1086 = vpack.c.b16 %v1060, %v1058
  %v1087 = vpack.c.b16 %v1063, %v1061
  %v1088 = vpack.c.b16 %v1064, %v1062
  %v1089 = vpack.c.b16 %v1067, %v1065
  %v1090 = vpack.c.b16 %v1068, %v1066
  %v1091 = vpack.c.b16 %v1071, %v1069
  %v1092 = vpack.c.b16 %v1072, %v1070
  %v1093 = vpack.c.b16 %v1075, %v1073
  %v1094 = vpack.c.b16 %v1076, %v1074
  %v1095 = vpack.c.b16 %v1079, %v1077
  %v1096 = vpack.c.b16 %v1080, %v1078
  %1113 = vmatpush.bf16.msra.mxu0 %v1095
  %1114 = vmatpush.bf16.msra.mxu0 %v1093
  %1115 = vmatpush.bf16.msra.mxu0 %v1091
  %1116 = vmatpush.bf16.msra.mxu0 %v1089
  %1117 = vmatpush.bf16.msra.mxu0 %v1087
  %1118 = vmatpush.bf16.msra.mxu0 %v1085
  %1119 = vmatpush.bf16.msra.mxu0 %v1083
  %1120 = vmatpush.bf16.msra.mxu0 %v1081
  %1121 = vmatmul.bf16.gmra.mxu0 %v1015
  %v1122 = vpop.f32.mrf.mxu0
  %v1123 = vadd.f32 0.0, %v1122
  %v1124 = vpop.f32.mrf.mxu0
  %1125 = vdwg.mxu0
  %1126 = vmatpush.bf16.msra.mxu0 %v1096
  %1127 = vmatpush.bf16.msra.mxu0 %v1094
  %1128 = vmatpush.bf16.msra.mxu0 %v1092
  %1129 = vmatpush.bf16.msra.mxu0 %v1090
  %1130 = vmatpush.bf16.msra.mxu0 %v1088
  %1131 = vmatpush.bf16.msra.mxu0 %v1086
  %1132 = vmatpush.bf16.msra.mxu0 %v1084
  %1133 = vmatpush.bf16.msra.mxu0 %v1082
  %1134 = vmatmul.bf16.gmra.mxu0 %v1015
  %v1135 = vpop.f32.mrf.mxu0
  %v1136 = vadd.f32 0.0, %v1135
  %v1137 = vpop.f32.mrf.mxu0
  %1138 = vdwg.mxu0
  %v1139 = vadd.f32 %v1012, %v1123
  %v1140 = vadd.f32 %v1013, %v1136
  %v1141 = vld [vmem:[#allocation2 + $0x30] sm:$0xff]
  %v1142 = vpack.c.bf16 %v1141, %v1141
  %s1143 = scalar_lea.vmem %s3, 768
  %v1144 = vld [vmem:[%s1143] sm:$0xff]
  %v1145 = vld [vmem:[%s1143 + $0x8] sm:$0xff]
  %v1146 = vld [vmem:[%s1143 + $0x10] sm:$0xff]
  %v1147 = vld [vmem:[%s1143 + $0x18] sm:$0xff]
  %v1148 = vld [vmem:[%s1143 + $0x20] sm:$0xff]
  %v1149 = vld [vmem:[%s1143 + $0x28] sm:$0xff]
  %v1150 = vld [vmem:[%s1143 + $0x30] sm:$0xff]
  %v1151 = vld [vmem:[%s1143 + $0x38] sm:$0xff]
  %v1152 = vld [vmem:[%s1143 + $0x40] sm:$0xff]
  %v1153 = vld [vmem:[%s1143 + $0x48] sm:$0xff]
  %v1154 = vld [vmem:[%s1143 + $0x50] sm:$0xff]
  %v1155 = vld [vmem:[%s1143 + $0x58] sm:$0xff]
  %v1156 = vld [vmem:[%s1143 + $0x60] sm:$0xff]
  %v1157 = vld [vmem:[%s1143 + $0x68] sm:$0xff]
  %v1158 = vld [vmem:[%s1143 + $0x70] sm:$0xff]
  %v1159 = vld [vmem:[%s1143 + $0x78] sm:$0xff]
  %v1176 = vunpack.c.l.b16 %v1144
  %v1177 = vunpack.c.h.b16 %v1144
  %v1178 = vunpack.c.l.b16 %v1145
  %v1179 = vunpack.c.h.b16 %v1145
  %v1180 = vunpack.c.l.b16 %v1146
  %v1181 = vunpack.c.h.b16 %v1146
  %v1182 = vunpack.c.l.b16 %v1147
  %v1183 = vunpack.c.h.b16 %v1147
  %v1184 = vunpack.c.l.b16 %v1148
  %v1185 = vunpack.c.h.b16 %v1148
  %v1186 = vunpack.c.l.b16 %v1149
  %v1187 = vunpack.c.h.b16 %v1149
  %v1188 = vunpack.c.l.b16 %v1150
  %v1189 = vunpack.c.h.b16 %v1150
  %v1190 = vunpack.c.l.b16 %v1151
  %v1191 = vunpack.c.h.b16 %v1151
  %v1192 = vunpack.c.l.b16 %v1152
  %v1193 = vunpack.c.h.b16 %v1152
  %v1194 = vunpack.c.l.b16 %v1153
  %v1195 = vunpack.c.h.b16 %v1153
  %v1196 = vunpack.c.l.b16 %v1154
  %v1197 = vunpack.c.h.b16 %v1154
  %v1198 = vunpack.c.l.b16 %v1155
  %v1199 = vunpack.c.h.b16 %v1155
  %v1200 = vunpack.c.l.b16 %v1156
  %v1201 = vunpack.c.h.b16 %v1156
  %v1202 = vunpack.c.l.b16 %v1157
  %v1203 = vunpack.c.h.b16 %v1157
  %v1204 = vunpack.c.l.b16 %v1158
  %v1205 = vunpack.c.h.b16 %v1158
  %v1206 = vunpack.c.l.b16 %v1159
  %v1207 = vunpack.c.h.b16 %v1159
  %v1208 = vpack.c.b16 %v1178, %v1176
  %v1209 = vpack.c.b16 %v1179, %v1177
  %v1210 = vpack.c.b16 %v1182, %v1180
  %v1211 = vpack.c.b16 %v1183, %v1181
  %v1212 = vpack.c.b16 %v1186, %v1184
  %v1213 = vpack.c.b16 %v1187, %v1185
  %v1214 = vpack.c.b16 %v1190, %v1188
  %v1215 = vpack.c.b16 %v1191, %v1189
  %v1216 = vpack.c.b16 %v1194, %v1192
  %v1217 = vpack.c.b16 %v1195, %v1193
  %v1218 = vpack.c.b16 %v1198, %v1196
  %v1219 = vpack.c.b16 %v1199, %v1197
  %v1220 = vpack.c.b16 %v1202, %v1200
  %v1221 = vpack.c.b16 %v1203, %v1201
  %v1222 = vpack.c.b16 %v1206, %v1204
  %v1223 = vpack.c.b16 %v1207, %v1205
  %1240 = vmatpush.bf16.msra.mxu0 %v1222
  %1241 = vmatpush.bf16.msra.mxu0 %v1220
  %1242 = vmatpush.bf16.msra.mxu0 %v1218
  %1243 = vmatpush.bf16.msra.mxu0 %v1216
  %1244 = vmatpush.bf16.msra.mxu0 %v1214
  %1245 = vmatpush.bf16.msra.mxu0 %v1212
  %1246 = vmatpush.bf16.msra.mxu0 %v1210
  %1247 = vmatpush.bf16.msra.mxu0 %v1208
  %1248 = vmatmul.bf16.gmra.mxu0 %v1142
  %v1249 = vpop.f32.mrf.mxu0
  %v1250 = vadd.f32 0.0, %v1249
  %v1251 = vpop.f32.mrf.mxu0
  %1252 = vdwg.mxu0
  %1253 = vmatpush.bf16.msra.mxu0 %v1223
  %1254 = vmatpush.bf16.msra.mxu0 %v1221
  %1255 = vmatpush.bf16.msra.mxu0 %v1219
  %1256 = vmatpush.bf16.msra.mxu0 %v1217
  %1257 = vmatpush.bf16.msra.mxu0 %v1215
  %1258 = vmatpush.bf16.msra.mxu0 %v1213
  %1259 = vmatpush.bf16.msra.mxu0 %v1211
  %1260 = vmatpush.bf16.msra.mxu0 %v1209
  %1261 = vmatmul.bf16.gmra.mxu0 %v1142
  %v1262 = vpop.f32.mrf.mxu0
  %v1263 = vadd.f32 0.0, %v1262
  %v1264 = vpop.f32.mrf.mxu0
  %1265 = vdwg.mxu0
  %v1266 = vadd.f32 %v1139, %v1250
  %v1267 = vadd.f32 %v1140, %v1263
  %v1268 = vld [vmem:[#allocation2 + $0x38] sm:$0xff]
  %v1269 = vpack.c.bf16 %v1268, %v1268
  %s1270 = scalar_lea.vmem %s3, 896
  %v1271 = vld [vmem:[%s1270] sm:$0xff]
  %v1272 = vld [vmem:[%s1270 + $0x8] sm:$0xff]
  %v1273 = vld [vmem:[%s1270 + $0x10] sm:$0xff]
  %v1274 = vld [vmem:[%s1270 + $0x18] sm:$0xff]
  %v1275 = vld [vmem:[%s1270 + $0x20] sm:$0xff]
  %v1276 = vld [vmem:[%s1270 + $0x28] sm:$0xff]
  %v1277 = vld [vmem:[%s1270 + $0x30] sm:$0xff]
  %v1278 = vld [vmem:[%s1270 + $0x38] sm:$0xff]
  %v1279 = vld [vmem:[%s1270 + $0x40] sm:$0xff]
  %v1280 = vld [vmem:[%s1270 + $0x48] sm:$0xff]
  %v1281 = vld [vmem:[%s1270 + $0x50] sm:$0xff]
  %v1282 = vld [vmem:[%s1270 + $0x58] sm:$0xff]
  %v1283 = vld [vmem:[%s1270 + $0x60] sm:$0xff]
  %v1284 = vld [vmem:[%s1270 + $0x68] sm:$0xff]
  %v1285 = vld [vmem:[%s1270 + $0x70] sm:$0xff]
  %v1286 = vld [vmem:[%s1270 + $0x78] sm:$0xff]
  %v1303 = vunpack.c.l.b16 %v1271
  %v1304 = vunpack.c.h.b16 %v1271
  %v1305 = vunpack.c.l.b16 %v1272
  %v1306 = vunpack.c.h.b16 %v1272
  %v1307 = vunpack.c.l.b16 %v1273
  %v1308 = vunpack.c.h.b16 %v1273
  %v1309 = vunpack.c.l.b16 %v1274
  %v1310 = vunpack.c.h.b16 %v1274
  %v1311 = vunpack.c.l.b16 %v1275
  %v1312 = vunpack.c.h.b16 %v1275
  %v1313 = vunpack.c.l.b16 %v1276
  %v1314 = vunpack.c.h.b16 %v1276
  %v1315 = vunpack.c.l.b16 %v1277
  %v1316 = vunpack.c.h.b16 %v1277
  %v1317 = vunpack.c.l.b16 %v1278
  %v1318 = vunpack.c.h.b16 %v1278
  %v1319 = vunpack.c.l.b16 %v1279
  %v1320 = vunpack.c.h.b16 %v1279
  %v1321 = vunpack.c.l.b16 %v1280
  %v1322 = vunpack.c.h.b16 %v1280
  %v1323 = vunpack.c.l.b16 %v1281
  %v1324 = vunpack.c.h.b16 %v1281
  %v1325 = vunpack.c.l.b16 %v1282
  %v1326 = vunpack.c.h.b16 %v1282
  %v1327 = vunpack.c.l.b16 %v1283
  %v1328 = vunpack.c.h.b16 %v1283
  %v1329 = vunpack.c.l.b16 %v1284
  %v1330 = vunpack.c.h.b16 %v1284
  %v1331 = vunpack.c.l.b16 %v1285
  %v1332 = vunpack.c.h.b16 %v1285
  %v1333 = vunpack.c.l.b16 %v1286
  %v1334 = vunpack.c.h.b16 %v1286
  %v1335 = vpack.c.b16 %v1305, %v1303
  %v1336 = vpack.c.b16 %v1306, %v1304
  %v1337 = vpack.c.b16 %v1309, %v1307
  %v1338 = vpack.c.b16 %v1310, %v1308
  %v1339 = vpack.c.b16 %v1313, %v1311
  %v1340 = vpack.c.b16 %v1314, %v1312
  %v1341 = vpack.c.b16 %v1317, %v1315
  %v1342 = vpack.c.b16 %v1318, %v1316
  %v1343 = vpack.c.b16 %v1321, %v1319
  %v1344 = vpack.c.b16 %v1322, %v1320
  %v1345 = vpack.c.b16 %v1325, %v1323
  %v1346 = vpack.c.b16 %v1326, %v1324
  %v1347 = vpack.c.b16 %v1329, %v1327
  %v1348 = vpack.c.b16 %v1330, %v1328
  %v1349 = vpack.c.b16 %v1333, %v1331
  %v1350 = vpack.c.b16 %v1334, %v1332
  %1367 = vmatpush.bf16.msra.mxu0 %v1349
  %1368 = vmatpush.bf16.msra.mxu0 %v1347
  %1369 = vmatpush.bf16.msra.mxu0 %v1345
  %1370 = vmatpush.bf16.msra.mxu0 %v1343
  %1371 = vmatpush.bf16.msra.mxu0 %v1341
  %1372 = vmatpush.bf16.msra.mxu0 %v1339
  %1373 = vmatpush.bf16.msra.mxu0 %v1337
  %1374 = vmatpush.bf16.msra.mxu0 %v1335
  %1375 = vmatmul.bf16.gmra.mxu0 %v1269
  %v1376 = vpop.f32.mrf.mxu0
  %v1377 = vadd.f32 0.0, %v1376
  %v1378 = vpop.f32.mrf.mxu0
  %1379 = vdwg.mxu0
  %1380 = vmatpush.bf16.msra.mxu0 %v1350
  %1381 = vmatpush.bf16.msra.mxu0 %v1348
  %1382 = vmatpush.bf16.msra.mxu0 %v1346
  %1383 = vmatpush.bf16.msra.mxu0 %v1344
  %1384 = vmatpush.bf16.msra.mxu0 %v1342
  %1385 = vmatpush.bf16.msra.mxu0 %v1340
  %1386 = vmatpush.bf16.msra.mxu0 %v1338
  %1387 = vmatpush.bf16.msra.mxu0 %v1336
  %1388 = vmatmul.bf16.gmra.mxu0 %v1269
  %v1389 = vpop.f32.mrf.mxu0
  %v1390 = vadd.f32 0.0, %v1389
  %v1391 = vpop.f32.mrf.mxu0
  %1392 = vdwg.mxu0
  %v1393 = vadd.f32 %v1266, %v1377
  %v1394 = vadd.f32 %v1267, %v1390
  %v1395 = vld [vmem:[#allocation2 + $0x40] sm:$0xff]
  %v1396 = vpack.c.bf16 %v1395, %v1395
  %s1397 = scalar_lea.vmem %s3, 1024
  %v1398 = vld [vmem:[%s1397] sm:$0xff]
  %v1399 = vld [vmem:[%s1397 + $0x8] sm:$0xff]
  %v1400 = vld [vmem:[%s1397 + $0x10] sm:$0xff]
  %v1401 = vld [vmem:[%s1397 + $0x18] sm:$0xff]
  %v1402 = vld [vmem:[%s1397 + $0x20] sm:$0xff]
  %v1403 = vld [vmem:[%s1397 + $0x28] sm:$0xff]
  %v1404 = vld [vmem:[%s1397 + $0x30] sm:$0xff]
  %v1405 = vld [vmem:[%s1397 + $0x38] sm:$0xff]
  %v1406 = vld [vmem:[%s1397 + $0x40] sm:$0xff]
  %v1407 = vld [vmem:[%s1397 + $0x48] sm:$0xff]
  %v1408 = vld [vmem:[%s1397 + $0x50] sm:$0xff]
  %v1409 = vld [vmem:[%s1397 + $0x58] sm:$0xff]
  %v1410 = vld [vmem:[%s1397 + $0x60] sm:$0xff]
  %v1411 = vld [vmem:[%s1397 + $0x68] sm:$0xff]
  %v1412 = vld [vmem:[%s1397 + $0x70] sm:$0xff]
  %v1413 = vld [vmem:[%s1397 + $0x78] sm:$0xff]
  %v1430 = vunpack.c.l.b16 %v1398
  %v1431 = vunpack.c.h.b16 %v1398
  %v1432 = vunpack.c.l.b16 %v1399
  %v1433 = vunpack.c.h.b16 %v1399
  %v1434 = vunpack.c.l.b16 %v1400
  %v1435 = vunpack.c.h.b16 %v1400
  %v1436 = vunpack.c.l.b16 %v1401
  %v1437 = vunpack.c.h.b16 %v1401
  %v1438 = vunpack.c.l.b16 %v1402
  %v1439 = vunpack.c.h.b16 %v1402
  %v1440 = vunpack.c.l.b16 %v1403
  %v1441 = vunpack.c.h.b16 %v1403
  %v1442 = vunpack.c.l.b16 %v1404
  %v1443 = vunpack.c.h.b16 %v1404
  %v1444 = vunpack.c.l.b16 %v1405
  %v1445 = vunpack.c.h.b16 %v1405
  %v1446 = vunpack.c.l.b16 %v1406
  %v1447 = vunpack.c.h.b16 %v1406
  %v1448 = vunpack.c.l.b16 %v1407
  %v1449 = vunpack.c.h.b16 %v1407
  %v1450 = vunpack.c.l.b16 %v1408
  %v1451 = vunpack.c.h.b16 %v1408
  %v1452 = vunpack.c.l.b16 %v1409
  %v1453 = vunpack.c.h.b16 %v1409
  %v1454 = vunpack.c.l.b16 %v1410
  %v1455 = vunpack.c.h.b16 %v1410
  %v1456 = vunpack.c.l.b16 %v1411
  %v1457 = vunpack.c.h.b16 %v1411
  %v1458 = vunpack.c.l.b16 %v1412
  %v1459 = vunpack.c.h.b16 %v1412
  %v1460 = vunpack.c.l.b16 %v1413
  %v1461 = vunpack.c.h.b16 %v1413
  %v1462 = vpack.c.b16 %v1432, %v1430
  %v1463 = vpack.c.b16 %v1433, %v1431
  %v1464 = vpack.c.b16 %v1436, %v1434
  %v1465 = vpack.c.b16 %v1437, %v1435
  %v1466 = vpack.c.b16 %v1440, %v1438
  %v1467 = vpack.c.b16 %v1441, %v1439
  %v1468 = vpack.c.b16 %v1444, %v1442
  %v1469 = vpack.c.b16 %v1445, %v1443
  %v1470 = vpack.c.b16 %v1448, %v1446
  %v1471 = vpack.c.b16 %v1449, %v1447
  %v1472 = vpack.c.b16 %v1452, %v1450
  %v1473 = vpack.c.b16 %v1453, %v1451
  %v1474 = vpack.c.b16 %v1456, %v1454
  %v1475 = vpack.c.b16 %v1457, %v1455
  %v1476 = vpack.c.b16 %v1460, %v1458
  %v1477 = vpack.c.b16 %v1461, %v1459
  %1494 = vmatpush.bf16.msra.mxu0 %v1476
  %1495 = vmatpush.bf16.msra.mxu0 %v1474
  %1496 = vmatpush.bf16.msra.mxu0 %v1472
  %1497 = vmatpush.bf16.msra.mxu0 %v1470
  %1498 = vmatpush.bf16.msra.mxu0 %v1468
  %1499 = vmatpush.bf16.msra.mxu0 %v1466
  %1500 = vmatpush.bf16.msra.mxu0 %v1464
  %1501 = vmatpush.bf16.msra.mxu0 %v1462
  %1502 = vmatmul.bf16.gmra.mxu0 %v1396
  %v1503 = vpop.f32.mrf.mxu0
  %v1504 = vadd.f32 0.0, %v1503
  %v1505 = vpop.f32.mrf.mxu0
  %1506 = vdwg.mxu0
  %1507 = vmatpush.bf16.msra.mxu0 %v1477
  %1508 = vmatpush.bf16.msra.mxu0 %v1475
  %1509 = vmatpush.bf16.msra.mxu0 %v1473
  %1510 = vmatpush.bf16.msra.mxu0 %v1471
  %1511 = vmatpush.bf16.msra.mxu0 %v1469
  %1512 = vmatpush.bf16.msra.mxu0 %v1467
  %1513 = vmatpush.bf16.msra.mxu0 %v1465
  %1514 = vmatpush.bf16.msra.mxu0 %v1463
  %1515 = vmatmul.bf16.gmra.mxu0 %v1396
  %v1516 = vpop.f32.mrf.mxu0
  %v1517 = vadd.f32 0.0, %v1516
  %v1518 = vpop.f32.mrf.mxu0
  %1519 = vdwg.mxu0
  %v1520 = vadd.f32 %v1393, %v1504
  %v1521 = vadd.f32 %v1394, %v1517
  %v1522 = vld [vmem:[#allocation2 + $0x48] sm:$0xff]
  %v1523 = vpack.c.bf16 %v1522, %v1522
  %s1524 = scalar_lea.vmem %s3, 1152
  %v1525 = vld [vmem:[%s1524] sm:$0xff]
  %v1526 = vld [vmem:[%s1524 + $0x8] sm:$0xff]
  %v1527 = vld [vmem:[%s1524 + $0x10] sm:$0xff]
  %v1528 = vld [vmem:[%s1524 + $0x18] sm:$0xff]
  %v1529 = vld [vmem:[%s1524 + $0x20] sm:$0xff]
  %v1530 = vld [vmem:[%s1524 + $0x28] sm:$0xff]
  %v1531 = vld [vmem:[%s1524 + $0x30] sm:$0xff]
  %v1532 = vld [vmem:[%s1524 + $0x38] sm:$0xff]
  %v1533 = vld [vmem:[%s1524 + $0x40] sm:$0xff]
  %v1534 = vld [vmem:[%s1524 + $0x48] sm:$0xff]
  %v1535 = vld [vmem:[%s1524 + $0x50] sm:$0xff]
  %v1536 = vld [vmem:[%s1524 + $0x58] sm:$0xff]
  %v1537 = vld [vmem:[%s1524 + $0x60] sm:$0xff]
  %v1538 = vld [vmem:[%s1524 + $0x68] sm:$0xff]
  %v1539 = vld [vmem:[%s1524 + $0x70] sm:$0xff]
  %v1540 = vld [vmem:[%s1524 + $0x78] sm:$0xff]
  %v1557 = vunpack.c.l.b16 %v1525
  %v1558 = vunpack.c.h.b16 %v1525
  %v1559 = vunpack.c.l.b16 %v1526
  %v1560 = vunpack.c.h.b16 %v1526
  %v1561 = vunpack.c.l.b16 %v1527
  %v1562 = vunpack.c.h.b16 %v1527
  %v1563 = vunpack.c.l.b16 %v1528
  %v1564 = vunpack.c.h.b16 %v1528
  %v1565 = vunpack.c.l.b16 %v1529
  %v1566 = vunpack.c.h.b16 %v1529
  %v1567 = vunpack.c.l.b16 %v1530
  %v1568 = vunpack.c.h.b16 %v1530
  %v1569 = vunpack.c.l.b16 %v1531
  %v1570 = vunpack.c.h.b16 %v1531
  %v1571 = vunpack.c.l.b16 %v1532
  %v1572 = vunpack.c.h.b16 %v1532
  %v1573 = vunpack.c.l.b16 %v1533
  %v1574 = vunpack.c.h.b16 %v1533
  %v1575 = vunpack.c.l.b16 %v1534
  %v1576 = vunpack.c.h.b16 %v1534
  %v1577 = vunpack.c.l.b16 %v1535
  %v1578 = vunpack.c.h.b16 %v1535
  %v1579 = vunpack.c.l.b16 %v1536
  %v1580 = vunpack.c.h.b16 %v1536
  %v1581 = vunpack.c.l.b16 %v1537
  %v1582 = vunpack.c.h.b16 %v1537
  %v1583 = vunpack.c.l.b16 %v1538
  %v1584 = vunpack.c.h.b16 %v1538
  %v1585 = vunpack.c.l.b16 %v1539
  %v1586 = vunpack.c.h.b16 %v1539
  %v1587 = vunpack.c.l.b16 %v1540
  %v1588 = vunpack.c.h.b16 %v1540
  %v1589 = vpack.c.b16 %v1559, %v1557
  %v1590 = vpack.c.b16 %v1560, %v1558
  %v1591 = vpack.c.b16 %v1563, %v1561
  %v1592 = vpack.c.b16 %v1564, %v1562
  %v1593 = vpack.c.b16 %v1567, %v1565
  %v1594 = vpack.c.b16 %v1568, %v1566
  %v1595 = vpack.c.b16 %v1571, %v1569
  %v1596 = vpack.c.b16 %v1572, %v1570
  %v1597 = vpack.c.b16 %v1575, %v1573
  %v1598 = vpack.c.b16 %v1576, %v1574
  %v1599 = vpack.c.b16 %v1579, %v1577
  %v1600 = vpack.c.b16 %v1580, %v1578
  %v1601 = vpack.c.b16 %v1583, %v1581
  %v1602 = vpack.c.b16 %v1584, %v1582
  %v1603 = vpack.c.b16 %v1587, %v1585
  %v1604 = vpack.c.b16 %v1588, %v1586
  %1621 = vmatpush.bf16.msra.mxu0 %v1603
  %1622 = vmatpush.bf16.msra.mxu0 %v1601
  %1623 = vmatpush.bf16.msra.mxu0 %v1599
  %1624 = vmatpush.bf16.msra.mxu0 %v1597
  %1625 = vmatpush.bf16.msra.mxu0 %v1595
  %1626 = vmatpush.bf16.msra.mxu0 %v1593
  %1627 = vmatpush.bf16.msra.mxu0 %v1591
  %1628 = vmatpush.bf16.msra.mxu0 %v1589
  %1629 = vmatmul.bf16.gmra.mxu0 %v1523
  %v1630 = vpop.f32.mrf.mxu0
  %v1631 = vadd.f32 0.0, %v1630
  %v1632 = vpop.f32.mrf.mxu0
  %1633 = vdwg.mxu0
  %1634 = vmatpush.bf16.msra.mxu0 %v1604
  %1635 = vmatpush.bf16.msra.mxu0 %v1602
  %1636 = vmatpush.bf16.msra.mxu0 %v1600
  %1637 = vmatpush.bf16.msra.mxu0 %v1598
  %1638 = vmatpush.bf16.msra.mxu0 %v1596
  %1639 = vmatpush.bf16.msra.mxu0 %v1594
  %1640 = vmatpush.bf16.msra.mxu0 %v1592
  %1641 = vmatpush.bf16.msra.mxu0 %v1590
  %1642 = vmatmul.bf16.gmra.mxu0 %v1523
  %v1643 = vpop.f32.mrf.mxu0
  %v1644 = vadd.f32 0.0, %v1643
  %v1645 = vpop.f32.mrf.mxu0
  %1646 = vdwg.mxu0
  %v1647 = vadd.f32 %v1520, %v1631
  %v1648 = vadd.f32 %v1521, %v1644
  %v1649 = vld [vmem:[#allocation2 + $0x50] sm:$0xff]
  %v1650 = vpack.c.bf16 %v1649, %v1649
  %s1651 = scalar_lea.vmem %s3, 1280
  %v1652 = vld [vmem:[%s1651] sm:$0xff]
  %v1653 = vld [vmem:[%s1651 + $0x8] sm:$0xff]
  %v1654 = vld [vmem:[%s1651 + $0x10] sm:$0xff]
  %v1655 = vld [vmem:[%s1651 + $0x18] sm:$0xff]
  %v1656 = vld [vmem:[%s1651 + $0x20] sm:$0xff]
  %v1657 = vld [vmem:[%s1651 + $0x28] sm:$0xff]
  %v1658 = vld [vmem:[%s1651 + $0x30] sm:$0xff]
  %v1659 = vld [vmem:[%s1651 + $0x38] sm:$0xff]
  %v1660 = vld [vmem:[%s1651 + $0x40] sm:$0xff]
  %v1661 = vld [vmem:[%s1651 + $0x48] sm:$0xff]
  %v1662 = vld [vmem:[%s1651 + $0x50] sm:$0xff]
  %v1663 = vld [vmem:[%s1651 + $0x58] sm:$0xff]
  %v1664 = vld [vmem:[%s1651 + $0x60] sm:$0xff]
  %v1665 = vld [vmem:[%s1651 + $0x68] sm:$0xff]
  %v1666 = vld [vmem:[%s1651 + $0x70] sm:$0xff]
  %v1667 = vld [vmem:[%s1651 + $0x78] sm:$0xff]
  %v1684 = vunpack.c.l.b16 %v1652
  %v1685 = vunpack.c.h.b16 %v1652
  %v1686 = vunpack.c.l.b16 %v1653
  %v1687 = vunpack.c.h.b16 %v1653
  %v1688 = vunpack.c.l.b16 %v1654
  %v1689 = vunpack.c.h.b16 %v1654
  %v1690 = vunpack.c.l.b16 %v1655
  %v1691 = vunpack.c.h.b16 %v1655
  %v1692 = vunpack.c.l.b16 %v1656
  %v1693 = vunpack.c.h.b16 %v1656
  %v1694 = vunpack.c.l.b16 %v1657
  %v1695 = vunpack.c.h.b16 %v1657
  %v1696 = vunpack.c.l.b16 %v1658
  %v1697 = vunpack.c.h.b16 %v1658
  %v1698 = vunpack.c.l.b16 %v1659
  %v1699 = vunpack.c.h.b16 %v1659
  %v1700 = vunpack.c.l.b16 %v1660
  %v1701 = vunpack.c.h.b16 %v1660
  %v1702 = vunpack.c.l.b16 %v1661
  %v1703 = vunpack.c.h.b16 %v1661
  %v1704 = vunpack.c.l.b16 %v1662
  %v1705 = vunpack.c.h.b16 %v1662
  %v1706 = vunpack.c.l.b16 %v1663
  %v1707 = vunpack.c.h.b16 %v1663
  %v1708 = vunpack.c.l.b16 %v1664
  %v1709 = vunpack.c.h.b16 %v1664
  %v1710 = vunpack.c.l.b16 %v1665
  %v1711 = vunpack.c.h.b16 %v1665
  %v1712 = vunpack.c.l.b16 %v1666
  %v1713 = vunpack.c.h.b16 %v1666
  %v1714 = vunpack.c.l.b16 %v1667
  %v1715 = vunpack.c.h.b16 %v1667
  %v1716 = vpack.c.b16 %v1686, %v1684
  %v1717 = vpack.c.b16 %v1687, %v1685
  %v1718 = vpack.c.b16 %v1690, %v1688
  %v1719 = vpack.c.b16 %v1691, %v1689
  %v1720 = vpack.c.b16 %v1694, %v1692
  %v1721 = vpack.c.b16 %v1695, %v1693
  %v1722 = vpack.c.b16 %v1698, %v1696
  %v1723 = vpack.c.b16 %v1699, %v1697
  %v1724 = vpack.c.b16 %v1702, %v1700
  %v1725 = vpack.c.b16 %v1703, %v1701
  %v1726 = vpack.c.b16 %v1706, %v1704
  %v1727 = vpack.c.b16 %v1707, %v1705
  %v1728 = vpack.c.b16 %v1710, %v1708
  %v1729 = vpack.c.b16 %v1711, %v1709
  %v1730 = vpack.c.b16 %v1714, %v1712
  %v1731 = vpack.c.b16 %v1715, %v1713
  %1748 = vmatpush.bf16.msra.mxu0 %v1730
  %1749 = vmatpush.bf16.msra.mxu0 %v1728
  %1750 = vmatpush.bf16.msra.mxu0 %v1726
  %1751 = vmatpush.bf16.msra.mxu0 %v1724
  %1752 = vmatpush.bf16.msra.mxu0 %v1722
  %1753 = vmatpush.bf16.msra.mxu0 %v1720
  %1754 = vmatpush.bf16.msra.mxu0 %v1718
  %1755 = vmatpush.bf16.msra.mxu0 %v1716
  %1756 = vmatmul.bf16.gmra.mxu0 %v1650
  %v1757 = vpop.f32.mrf.mxu0
  %v1758 = vadd.f32 0.0, %v1757
  %v1759 = vpop.f32.mrf.mxu0
  %1760 = vdwg.mxu0
  %1761 = vmatpush.bf16.msra.mxu0 %v1731
  %1762 = vmatpush.bf16.msra.mxu0 %v1729
  %1763 = vmatpush.bf16.msra.mxu0 %v1727
  %1764 = vmatpush.bf16.msra.mxu0 %v1725
  %1765 = vmatpush.bf16.msra.mxu0 %v1723
  %1766 = vmatpush.bf16.msra.mxu0 %v1721
  %1767 = vmatpush.bf16.msra.mxu0 %v1719
  %1768 = vmatpush.bf16.msra.mxu0 %v1717
  %1769 = vmatmul.bf16.gmra.mxu0 %v1650
  %v1770 = vpop.f32.mrf.mxu0
  %v1771 = vadd.f32 0.0, %v1770
  %v1772 = vpop.f32.mrf.mxu0
  %1773 = vdwg.mxu0
  %v1774 = vadd.f32 %v1647, %v1758
  %v1775 = vadd.f32 %v1648, %v1771
  %v1776 = vld [vmem:[#allocation2 + $0x58] sm:$0xff]
  %v1777 = vpack.c.bf16 %v1776, %v1776
  %s1778 = scalar_lea.vmem %s3, 1408
  %v1779 = vld [vmem:[%s1778] sm:$0xff]
  %v1780 = vld [vmem:[%s1778 + $0x8] sm:$0xff]
  %v1781 = vld [vmem:[%s1778 + $0x10] sm:$0xff]
  %v1782 = vld [vmem:[%s1778 + $0x18] sm:$0xff]
  %v1783 = vld [vmem:[%s1778 + $0x20] sm:$0xff]
  %v1784 = vld [vmem:[%s1778 + $0x28] sm:$0xff]
  %v1785 = vld [vmem:[%s1778 + $0x30] sm:$0xff]
  %v1786 = vld [vmem:[%s1778 + $0x38] sm:$0xff]
  %v1787 = vld [vmem:[%s1778 + $0x40] sm:$0xff]
  %v1788 = vld [vmem:[%s1778 + $0x48] sm:$0xff]
  %v1789 = vld [vmem:[%s1778 + $0x50] sm:$0xff]
  %v1790 = vld [vmem:[%s1778 + $0x58] sm:$0xff]
  %v1791 = vld [vmem:[%s1778 + $0x60] sm:$0xff]
  %v1792 = vld [vmem:[%s1778 + $0x68] sm:$0xff]
  %v1793 = vld [vmem:[%s1778 + $0x70] sm:$0xff]
  %v1794 = vld [vmem:[%s1778 + $0x78] sm:$0xff]
  %v1811 = vunpack.c.l.b16 %v1779
  %v1812 = vunpack.c.h.b16 %v1779
  %v1813 = vunpack.c.l.b16 %v1780
  %v1814 = vunpack.c.h.b16 %v1780
  %v1815 = vunpack.c.l.b16 %v1781
  %v1816 = vunpack.c.h.b16 %v1781
  %v1817 = vunpack.c.l.b16 %v1782
  %v1818 = vunpack.c.h.b16 %v1782
  %v1819 = vunpack.c.l.b16 %v1783
  %v1820 = vunpack.c.h.b16 %v1783
  %v1821 = vunpack.c.l.b16 %v1784
  %v1822 = vunpack.c.h.b16 %v1784
  %v1823 = vunpack.c.l.b16 %v1785
  %v1824 = vunpack.c.h.b16 %v1785
  %v1825 = vunpack.c.l.b16 %v1786
  %v1826 = vunpack.c.h.b16 %v1786
  %v1827 = vunpack.c.l.b16 %v1787
  %v1828 = vunpack.c.h.b16 %v1787
  %v1829 = vunpack.c.l.b16 %v1788
  %v1830 = vunpack.c.h.b16 %v1788
  %v1831 = vunpack.c.l.b16 %v1789
  %v1832 = vunpack.c.h.b16 %v1789
  %v1833 = vunpack.c.l.b16 %v1790
  %v1834 = vunpack.c.h.b16 %v1790
  %v1835 = vunpack.c.l.b16 %v1791
  %v1836 = vunpack.c.h.b16 %v1791
  %v1837 = vunpack.c.l.b16 %v1792
  %v1838 = vunpack.c.h.b16 %v1792
  %v1839 = vunpack.c.l.b16 %v1793
  %v1840 = vunpack.c.h.b16 %v1793
  %v1841 = vunpack.c.l.b16 %v1794
  %v1842 = vunpack.c.h.b16 %v1794
  %v1843 = vpack.c.b16 %v1813, %v1811
  %v1844 = vpack.c.b16 %v1814, %v1812
  %v1845 = vpack.c.b16 %v1817, %v1815
  %v1846 = vpack.c.b16 %v1818, %v1816
  %v1847 = vpack.c.b16 %v1821, %v1819
  %v1848 = vpack.c.b16 %v1822, %v1820
  %v1849 = vpack.c.b16 %v1825, %v1823
  %v1850 = vpack.c.b16 %v1826, %v1824
  %v1851 = vpack.c.b16 %v1829, %v1827
  %v1852 = vpack.c.b16 %v1830, %v1828
  %v1853 = vpack.c.b16 %v1833, %v1831
  %v1854 = vpack.c.b16 %v1834, %v1832
  %v1855 = vpack.c.b16 %v1837, %v1835
  %v1856 = vpack.c.b16 %v1838, %v1836
  %v1857 = vpack.c.b16 %v1841, %v1839
  %v1858 = vpack.c.b16 %v1842, %v1840
  %1875 = vmatpush.bf16.msra.mxu0 %v1857
  %1876 = vmatpush.bf16.msra.mxu0 %v1855
  %1877 = vmatpush.bf16.msra.mxu0 %v1853
  %1878 = vmatpush.bf16.msra.mxu0 %v1851
  %1879 = vmatpush.bf16.msra.mxu0 %v1849
  %1880 = vmatpush.bf16.msra.mxu0 %v1847
  %1881 = vmatpush.bf16.msra.mxu0 %v1845
  %1882 = vmatpush.bf16.msra.mxu0 %v1843
  %1883 = vmatmul.bf16.gmra.mxu0 %v1777
  %v1884 = vpop.f32.mrf.mxu0
  %v1885 = vadd.f32 0.0, %v1884
  %v1886 = vpop.f32.mrf.mxu0
  %1887 = vdwg.mxu0
  %1888 = vmatpush.bf16.msra.mxu0 %v1858
  %1889 = vmatpush.bf16.msra.mxu0 %v1856
  %1890 = vmatpush.bf16.msra.mxu0 %v1854
  %1891 = vmatpush.bf16.msra.mxu0 %v1852
  %1892 = vmatpush.bf16.msra.mxu0 %v1850
  %1893 = vmatpush.bf16.msra.mxu0 %v1848
  %1894 = vmatpush.bf16.msra.mxu0 %v1846
  %1895 = vmatpush.bf16.msra.mxu0 %v1844
  %1896 = vmatmul.bf16.gmra.mxu0 %v1777
  %v1897 = vpop.f32.mrf.mxu0
  %v1898 = vadd.f32 0.0, %v1897
  %v1899 = vpop.f32.mrf.mxu0
  %1900 = vdwg.mxu0
  %v1901 = vadd.f32 %v1774, %v1885
  %v1902 = vadd.f32 %v1775, %v1898
  %v1903 = vld [vmem:[#allocation2 + $0x60] sm:$0xff]
  %v1904 = vpack.c.bf16 %v1903, %v1903
  %s1905 = scalar_lea.vmem %s3, 1536
  %v1906 = vld [vmem:[%s1905] sm:$0xff]
  %v1907 = vld [vmem:[%s1905 + $0x8] sm:$0xff]
  %v1908 = vld [vmem:[%s1905 + $0x10] sm:$0xff]
  %v1909 = vld [vmem:[%s1905 + $0x18] sm:$0xff]
  %v1910 = vld [vmem:[%s1905 + $0x20] sm:$0xff]
  %v1911 = vld [vmem:[%s1905 + $0x28] sm:$0xff]
  %v1912 = vld [vmem:[%s1905 + $0x30] sm:$0xff]
  %v1913 = vld [vmem:[%s1905 + $0x38] sm:$0xff]
  %v1914 = vld [vmem:[%s1905 + $0x40] sm:$0xff]
  %v1915 = vld [vmem:[%s1905 + $0x48] sm:$0xff]
  %v1916 = vld [vmem:[%s1905 + $0x50] sm:$0xff]
  %v1917 = vld [vmem:[%s1905 + $0x58] sm:$0xff]
  %v1918 = vld [vmem:[%s1905 + $0x60] sm:$0xff]
  %v1919 = vld [vmem:[%s1905 + $0x68] sm:$0xff]
  %v1920 = vld [vmem:[%s1905 + $0x70] sm:$0xff]
  %v1921 = vld [vmem:[%s1905 + $0x78] sm:$0xff]
  %v1938 = vunpack.c.l.b16 %v1906
  %v1939 = vunpack.c.h.b16 %v1906
  %v1940 = vunpack.c.l.b16 %v1907
  %v1941 = vunpack.c.h.b16 %v1907
  %v1942 = vunpack.c.l.b16 %v1908
  %v1943 = vunpack.c.h.b16 %v1908
  %v1944 = vunpack.c.l.b16 %v1909
  %v1945 = vunpack.c.h.b16 %v1909
  %v1946 = vunpack.c.l.b16 %v1910
  %v1947 = vunpack.c.h.b16 %v1910
  %v1948 = vunpack.c.l.b16 %v1911
  %v1949 = vunpack.c.h.b16 %v1911
  %v1950 = vunpack.c.l.b16 %v1912
  %v1951 = vunpack.c.h.b16 %v1912
  %v1952 = vunpack.c.l.b16 %v1913
  %v1953 = vunpack.c.h.b16 %v1913
  %v1954 = vunpack.c.l.b16 %v1914
  %v1955 = vunpack.c.h.b16 %v1914
  %v1956 = vunpack.c.l.b16 %v1915
  %v1957 = vunpack.c.h.b16 %v1915
  %v1958 = vunpack.c.l.b16 %v1916
  %v1959 = vunpack.c.h.b16 %v1916
  %v1960 = vunpack.c.l.b16 %v1917
  %v1961 = vunpack.c.h.b16 %v1917
  %v1962 = vunpack.c.l.b16 %v1918
  %v1963 = vunpack.c.h.b16 %v1918
  %v1964 = vunpack.c.l.b16 %v1919
  %v1965 = vunpack.c.h.b16 %v1919
  %v1966 = vunpack.c.l.b16 %v1920
  %v1967 = vunpack.c.h.b16 %v1920
  %v1968 = vunpack.c.l.b16 %v1921
  %v1969 = vunpack.c.h.b16 %v1921
  %v1970 = vpack.c.b16 %v1940, %v1938
  %v1971 = vpack.c.b16 %v1941, %v1939
  %v1972 = vpack.c.b16 %v1944, %v1942
  %v1973 = vpack.c.b16 %v1945, %v1943
  %v1974 = vpack.c.b16 %v1948, %v1946
  %v1975 = vpack.c.b16 %v1949, %v1947
  %v1976 = vpack.c.b16 %v1952, %v1950
  %v1977 = vpack.c.b16 %v1953, %v1951
  %v1978 = vpack.c.b16 %v1956, %v1954
  %v1979 = vpack.c.b16 %v1957, %v1955
  %v1980 = vpack.c.b16 %v1960, %v1958
  %v1981 = vpack.c.b16 %v1961, %v1959
  %v1982 = vpack.c.b16 %v1964, %v1962
  %v1983 = vpack.c.b16 %v1965, %v1963
  %v1984 = vpack.c.b16 %v1968, %v1966
  %v1985 = vpack.c.b16 %v1969, %v1967
  %2002 = vmatpush.bf16.msra.mxu0 %v1984
  %2003 = vmatpush.bf16.msra.mxu0 %v1982
  %2004 = vmatpush.bf16.msra.mxu0 %v1980
  %2005 = vmatpush.bf16.msra.mxu0 %v1978
  %2006 = vmatpush.bf16.msra.mxu0 %v1976
  %2007 = vmatpush.bf16.msra.mxu0 %v1974
  %2008 = vmatpush.bf16.msra.mxu0 %v1972
  %2009 = vmatpush.bf16.msra.mxu0 %v1970
  %2010 = vmatmul.bf16.gmra.mxu0 %v1904
  %v2011 = vpop.f32.mrf.mxu0
  %v2012 = vadd.f32 0.0, %v2011
  %v2013 = vpop.f32.mrf.mxu0
  %2014 = vdwg.mxu0
  %2015 = vmatpush.bf16.msra.mxu0 %v1985
  %2016 = vmatpush.bf16.msra.mxu0 %v1983
  %2017 = vmatpush.bf16.msra.mxu0 %v1981
  %2018 = vmatpush.bf16.msra.mxu0 %v1979
  %2019 = vmatpush.bf16.msra.mxu0 %v1977
  %2020 = vmatpush.bf16.msra.mxu0 %v1975
  %2021 = vmatpush.bf16.msra.mxu0 %v1973
  %2022 = vmatpush.bf16.msra.mxu0 %v1971
  %2023 = vmatmul.bf16.gmra.mxu0 %v1904
  %v2024 = vpop.f32.mrf.mxu0
  %v2025 = vadd.f32 0.0, %v2024
  %v2026 = vpop.f32.mrf.mxu0
  %2027 = vdwg.mxu0
  %v2028 = vadd.f32 %v1901, %v2012
  %v2029 = vadd.f32 %v1902, %v2025
  %v2030 = vld [vmem:[#allocation2 + $0x68] sm:$0xff]
  %v2031 = vpack.c.bf16 %v2030, %v2030
  %s2032 = scalar_lea.vmem %s3, 1664
  %v2033 = vld [vmem:[%s2032] sm:$0xff]
  %v2034 = vld [vmem:[%s2032 + $0x8] sm:$0xff]
  %v2035 = vld [vmem:[%s2032 + $0x10] sm:$0xff]
  %v2036 = vld [vmem:[%s2032 + $0x18] sm:$0xff]
  %v2037 = vld [vmem:[%s2032 + $0x20] sm:$0xff]
  %v2038 = vld [vmem:[%s2032 + $0x28] sm:$0xff]
  %v2039 = vld [vmem:[%s2032 + $0x30] sm:$0xff]
  %v2040 = vld [vmem:[%s2032 + $0x38] sm:$0xff]
  %v2041 = vld [vmem:[%s2032 + $0x40] sm:$0xff]
  %v2042 = vld [vmem:[%s2032 + $0x48] sm:$0xff]
  %v2043 = vld [vmem:[%s2032 + $0x50] sm:$0xff]
  %v2044 = vld [vmem:[%s2032 + $0x58] sm:$0xff]
  %v2045 = vld [vmem:[%s2032 + $0x60] sm:$0xff]
  %v2046 = vld [vmem:[%s2032 + $0x68] sm:$0xff]
  %v2047 = vld [vmem:[%s2032 + $0x70] sm:$0xff]
  %v2048 = vld [vmem:[%s2032 + $0x78] sm:$0xff]
  %v2065 = vunpack.c.l.b16 %v2033
  %v2066 = vunpack.c.h.b16 %v2033
  %v2067 = vunpack.c.l.b16 %v2034
  %v2068 = vunpack.c.h.b16 %v2034
  %v2069 = vunpack.c.l.b16 %v2035
  %v2070 = vunpack.c.h.b16 %v2035
  %v2071 = vunpack.c.l.b16 %v2036
  %v2072 = vunpack.c.h.b16 %v2036
  %v2073 = vunpack.c.l.b16 %v2037
  %v2074 = vunpack.c.h.b16 %v2037
  %v2075 = vunpack.c.l.b16 %v2038
  %v2076 = vunpack.c.h.b16 %v2038
  %v2077 = vunpack.c.l.b16 %v2039
  %v2078 = vunpack.c.h.b16 %v2039
  %v2079 = vunpack.c.l.b16 %v2040
  %v2080 = vunpack.c.h.b16 %v2040
  %v2081 = vunpack.c.l.b16 %v2041
  %v2082 = vunpack.c.h.b16 %v2041
  %v2083 = vunpack.c.l.b16 %v2042
  %v2084 = vunpack.c.h.b16 %v2042
  %v2085 = vunpack.c.l.b16 %v2043
  %v2086 = vunpack.c.h.b16 %v2043
  %v2087 = vunpack.c.l.b16 %v2044
  %v2088 = vunpack.c.h.b16 %v2044
  %v2089 = vunpack.c.l.b16 %v2045
  %v2090 = vunpack.c.h.b16 %v2045
  %v2091 = vunpack.c.l.b16 %v2046
  %v2092 = vunpack.c.h.b16 %v2046
  %v2093 = vunpack.c.l.b16 %v2047
  %v2094 = vunpack.c.h.b16 %v2047
  %v2095 = vunpack.c.l.b16 %v2048
  %v2096 = vunpack.c.h.b16 %v2048
  %v2097 = vpack.c.b16 %v2067, %v2065
  %v2098 = vpack.c.b16 %v2068, %v2066
  %v2099 = vpack.c.b16 %v2071, %v2069
  %v2100 = vpack.c.b16 %v2072, %v2070
  %v2101 = vpack.c.b16 %v2075, %v2073
  %v2102 = vpack.c.b16 %v2076, %v2074
  %v2103 = vpack.c.b16 %v2079, %v2077
  %v2104 = vpack.c.b16 %v2080, %v2078
  %v2105 = vpack.c.b16 %v2083, %v2081
  %v2106 = vpack.c.b16 %v2084, %v2082
  %v2107 = vpack.c.b16 %v2087, %v2085
  %v2108 = vpack.c.b16 %v2088, %v2086
  %v2109 = vpack.c.b16 %v2091, %v2089
  %v2110 = vpack.c.b16 %v2092, %v2090
  %v2111 = vpack.c.b16 %v2095, %v2093
  %v2112 = vpack.c.b16 %v2096, %v2094
  %2129 = vmatpush.bf16.msra.mxu0 %v2111
  %2130 = vmatpush.bf16.msra.mxu0 %v2109
  %2131 = vmatpush.bf16.msra.mxu0 %v2107
  %2132 = vmatpush.bf16.msra.mxu0 %v2105
  %2133 = vmatpush.bf16.msra.mxu0 %v2103
  %2134 = vmatpush.bf16.msra.mxu0 %v2101
  %2135 = vmatpush.bf16.msra.mxu0 %v2099
  %2136 = vmatpush.bf16.msra.mxu0 %v2097
  %2137 = vmatmul.bf16.gmra.mxu0 %v2031
  %v2138 = vpop.f32.mrf.mxu0
  %v2139 = vadd.f32 0.0, %v2138
  %v2140 = vpop.f32.mrf.mxu0
  %2141 = vdwg.mxu0
  %2142 = vmatpush.bf16.msra.mxu0 %v2112
  %2143 = vmatpush.bf16.msra.mxu0 %v2110
  %2144 = vmatpush.bf16.msra.mxu0 %v2108
  %2145 = vmatpush.bf16.msra.mxu0 %v2106
  %2146 = vmatpush.bf16.msra.mxu0 %v2104
  %2147 = vmatpush.bf16.msra.mxu0 %v2102
  %2148 = vmatpush.bf16.msra.mxu0 %v2100
  %2149 = vmatpush.bf16.msra.mxu0 %v2098
  %2150 = vmatmul.bf16.gmra.mxu0 %v2031
  %v2151 = vpop.f32.mrf.mxu0
  %v2152 = vadd.f32 0.0, %v2151
  %v2153 = vpop.f32.mrf.mxu0
  %2154 = vdwg.mxu0
  %v2155 = vadd.f32 %v2028, %v2139
  %v2156 = vadd.f32 %v2029, %v2152
  %v2157 = vld [vmem:[#allocation2 + $0x70] sm:$0xff]
  %v2158 = vpack.c.bf16 %v2157, %v2157
  %s2159 = scalar_lea.vmem %s3, 1792
  %v2160 = vld [vmem:[%s2159] sm:$0xff]
  %v2161 = vld [vmem:[%s2159 + $0x8] sm:$0xff]
  %v2162 = vld [vmem:[%s2159 + $0x10] sm:$0xff]
  %v2163 = vld [vmem:[%s2159 + $0x18] sm:$0xff]
  %v2164 = vld [vmem:[%s2159 + $0x20] sm:$0xff]
  %v2165 = vld [vmem:[%s2159 + $0x28] sm:$0xff]
  %v2166 = vld [vmem:[%s2159 + $0x30] sm:$0xff]
  %v2167 = vld [vmem:[%s2159 + $0x38] sm:$0xff]
  %v2168 = vld [vmem:[%s2159 + $0x40] sm:$0xff]
  %v2169 = vld [vmem:[%s2159 + $0x48] sm:$0xff]
  %v2170 = vld [vmem:[%s2159 + $0x50] sm:$0xff]
  %v2171 = vld [vmem:[%s2159 + $0x58] sm:$0xff]
  %v2172 = vld [vmem:[%s2159 + $0x60] sm:$0xff]
  %v2173 = vld [vmem:[%s2159 + $0x68] sm:$0xff]
  %v2174 = vld [vmem:[%s2159 + $0x70] sm:$0xff]
  %v2175 = vld [vmem:[%s2159 + $0x78] sm:$0xff]
  %v2192 = vunpack.c.l.b16 %v2160
  %v2193 = vunpack.c.h.b16 %v2160
  %v2194 = vunpack.c.l.b16 %v2161
  %v2195 = vunpack.c.h.b16 %v2161
  %v2196 = vunpack.c.l.b16 %v2162
  %v2197 = vunpack.c.h.b16 %v2162
  %v2198 = vunpack.c.l.b16 %v2163
  %v2199 = vunpack.c.h.b16 %v2163
  %v2200 = vunpack.c.l.b16 %v2164
  %v2201 = vunpack.c.h.b16 %v2164
  %v2202 = vunpack.c.l.b16 %v2165
  %v2203 = vunpack.c.h.b16 %v2165
  %v2204 = vunpack.c.l.b16 %v2166
  %v2205 = vunpack.c.h.b16 %v2166
  %v2206 = vunpack.c.l.b16 %v2167
  %v2207 = vunpack.c.h.b16 %v2167
  %v2208 = vunpack.c.l.b16 %v2168
  %v2209 = vunpack.c.h.b16 %v2168
  %v2210 = vunpack.c.l.b16 %v2169
  %v2211 = vunpack.c.h.b16 %v2169
  %v2212 = vunpack.c.l.b16 %v2170
  %v2213 = vunpack.c.h.b16 %v2170
  %v2214 = vunpack.c.l.b16 %v2171
  %v2215 = vunpack.c.h.b16 %v2171
  %v2216 = vunpack.c.l.b16 %v2172
  %v2217 = vunpack.c.h.b16 %v2172
  %v2218 = vunpack.c.l.b16 %v2173
  %v2219 = vunpack.c.h.b16 %v2173
  %v2220 = vunpack.c.l.b16 %v2174
  %v2221 = vunpack.c.h.b16 %v2174
  %v2222 = vunpack.c.l.b16 %v2175
  %v2223 = vunpack.c.h.b16 %v2175
  %v2224 = vpack.c.b16 %v2194, %v2192
  %v2225 = vpack.c.b16 %v2195, %v2193
  %v2226 = vpack.c.b16 %v2198, %v2196
  %v2227 = vpack.c.b16 %v2199, %v2197
  %v2228 = vpack.c.b16 %v2202, %v2200
  %v2229 = vpack.c.b16 %v2203, %v2201
  %v2230 = vpack.c.b16 %v2206, %v2204
  %v2231 = vpack.c.b16 %v2207, %v2205
  %v2232 = vpack.c.b16 %v2210, %v2208
  %v2233 = vpack.c.b16 %v2211, %v2209
  %v2234 = vpack.c.b16 %v2214, %v2212
  %v2235 = vpack.c.b16 %v2215, %v2213
  %v2236 = vpack.c.b16 %v2218, %v2216
  %v2237 = vpack.c.b16 %v2219, %v2217
  %v2238 = vpack.c.b16 %v2222, %v2220
  %v2239 = vpack.c.b16 %v2223, %v2221
  %2256 = vmatpush.bf16.msra.mxu0 %v2238
  %2257 = vmatpush.bf16.msra.mxu0 %v2236
  %2258 = vmatpush.bf16.msra.mxu0 %v2234
  %2259 = vmatpush.bf16.msra.mxu0 %v2232
  %2260 = vmatpush.bf16.msra.mxu0 %v2230
  %2261 = vmatpush.bf16.msra.mxu0 %v2228
  %2262 = vmatpush.bf16.msra.mxu0 %v2226
  %2263 = vmatpush.bf16.msra.mxu0 %v2224
  %2264 = vmatmul.bf16.gmra.mxu0 %v2158
  %v2265 = vpop.f32.mrf.mxu0
  %v2266 = vadd.f32 0.0, %v2265
  %v2267 = vpop.f32.mrf.mxu0
  %2268 = vdwg.mxu0
  %2269 = vmatpush.bf16.msra.mxu0 %v2239
  %2270 = vmatpush.bf16.msra.mxu0 %v2237
  %2271 = vmatpush.bf16.msra.mxu0 %v2235
  %2272 = vmatpush.bf16.msra.mxu0 %v2233
  %2273 = vmatpush.bf16.msra.mxu0 %v2231
  %2274 = vmatpush.bf16.msra.mxu0 %v2229
  %2275 = vmatpush.bf16.msra.mxu0 %v2227
  %2276 = vmatpush.bf16.msra.mxu0 %v2225
  %2277 = vmatmul.bf16.gmra.mxu0 %v2158
  %v2278 = vpop.f32.mrf.mxu0
  %v2279 = vadd.f32 0.0, %v2278
  %v2280 = vpop.f32.mrf.mxu0
  %2281 = vdwg.mxu0
  %v2282 = vadd.f32 %v2155, %v2266
  %v2283 = vadd.f32 %v2156, %v2279
  %v2284 = vld [vmem:[#allocation2 + $0x78] sm:$0xff]
  %v2285 = vpack.c.bf16 %v2284, %v2284
  %s2286 = scalar_lea.vmem %s3, 1920
  %v2287 = vld [vmem:[%s2286] sm:$0xff]
  %v2288 = vld [vmem:[%s2286 + $0x8] sm:$0xff]
  %v2289 = vld [vmem:[%s2286 + $0x10] sm:$0xff]
  %v2290 = vld [vmem:[%s2286 + $0x18] sm:$0xff]
  %v2291 = vld [vmem:[%s2286 + $0x20] sm:$0xff]
  %v2292 = vld [vmem:[%s2286 + $0x28] sm:$0xff]
  %v2293 = vld [vmem:[%s2286 + $0x30] sm:$0xff]
  %v2294 = vld [vmem:[%s2286 + $0x38] sm:$0xff]
  %v2295 = vld [vmem:[%s2286 + $0x40] sm:$0xff]
  %v2296 = vld [vmem:[%s2286 + $0x48] sm:$0xff]
  %v2297 = vld [vmem:[%s2286 + $0x50] sm:$0xff]
  %v2298 = vld [vmem:[%s2286 + $0x58] sm:$0xff]
  %v2299 = vld [vmem:[%s2286 + $0x60] sm:$0xff]
  %v2300 = vld [vmem:[%s2286 + $0x68] sm:$0xff]
  %v2301 = vld [vmem:[%s2286 + $0x70] sm:$0xff]
  %v2302 = vld [vmem:[%s2286 + $0x78] sm:$0xff]
  %v2319 = vunpack.c.l.b16 %v2287
  %v2320 = vunpack.c.h.b16 %v2287
  %v2321 = vunpack.c.l.b16 %v2288
  %v2322 = vunpack.c.h.b16 %v2288
  %v2323 = vunpack.c.l.b16 %v2289
  %v2324 = vunpack.c.h.b16 %v2289
  %v2325 = vunpack.c.l.b16 %v2290
  %v2326 = vunpack.c.h.b16 %v2290
  %v2327 = vunpack.c.l.b16 %v2291
  %v2328 = vunpack.c.h.b16 %v2291
  %v2329 = vunpack.c.l.b16 %v2292
  %v2330 = vunpack.c.h.b16 %v2292
  %v2331 = vunpack.c.l.b16 %v2293
  %v2332 = vunpack.c.h.b16 %v2293
  %v2333 = vunpack.c.l.b16 %v2294
  %v2334 = vunpack.c.h.b16 %v2294
  %v2335 = vunpack.c.l.b16 %v2295
  %v2336 = vunpack.c.h.b16 %v2295
  %v2337 = vunpack.c.l.b16 %v2296
  %v2338 = vunpack.c.h.b16 %v2296
  %v2339 = vunpack.c.l.b16 %v2297
  %v2340 = vunpack.c.h.b16 %v2297
  %v2341 = vunpack.c.l.b16 %v2298
  %v2342 = vunpack.c.h.b16 %v2298
  %v2343 = vunpack.c.l.b16 %v2299
  %v2344 = vunpack.c.h.b16 %v2299
  %v2345 = vunpack.c.l.b16 %v2300
  %v2346 = vunpack.c.h.b16 %v2300
  %v2347 = vunpack.c.l.b16 %v2301
  %v2348 = vunpack.c.h.b16 %v2301
  %v2349 = vunpack.c.l.b16 %v2302
  %v2350 = vunpack.c.h.b16 %v2302
  %v2351 = vpack.c.b16 %v2321, %v2319
  %v2352 = vpack.c.b16 %v2322, %v2320
  %v2353 = vpack.c.b16 %v2325, %v2323
  %v2354 = vpack.c.b16 %v2326, %v2324
  %v2355 = vpack.c.b16 %v2329, %v2327
  %v2356 = vpack.c.b16 %v2330, %v2328
  %v2357 = vpack.c.b16 %v2333, %v2331
  %v2358 = vpack.c.b16 %v2334, %v2332
  %v2359 = vpack.c.b16 %v2337, %v2335
  %v2360 = vpack.c.b16 %v2338, %v2336
  %v2361 = vpack.c.b16 %v2341, %v2339
  %v2362 = vpack.c.b16 %v2342, %v2340
  %v2363 = vpack.c.b16 %v2345, %v2343
  %v2364 = vpack.c.b16 %v2346, %v2344
  %v2365 = vpack.c.b16 %v2349, %v2347
  %v2366 = vpack.c.b16 %v2350, %v2348
  %2383 = vmatpush.bf16.msra.mxu0 %v2365
  %2384 = vmatpush.bf16.msra.mxu0 %v2363
  %2385 = vmatpush.bf16.msra.mxu0 %v2361
  %2386 = vmatpush.bf16.msra.mxu0 %v2359
  %2387 = vmatpush.bf16.msra.mxu0 %v2357
  %2388 = vmatpush.bf16.msra.mxu0 %v2355
  %2389 = vmatpush.bf16.msra.mxu0 %v2353
  %2390 = vmatpush.bf16.msra.mxu0 %v2351
  %2391 = vmatmul.bf16.gmra.mxu0 %v2285
  %v2392 = vpop.f32.mrf.mxu0
  %v2393 = vadd.f32 0.0, %v2392
  %v2394 = vpop.f32.mrf.mxu0
  %2395 = vdwg.mxu0
  %2396 = vmatpush.bf16.msra.mxu0 %v2366
  %2397 = vmatpush.bf16.msra.mxu0 %v2364
  %2398 = vmatpush.bf16.msra.mxu0 %v2362
  %2399 = vmatpush.bf16.msra.mxu0 %v2360
  %2400 = vmatpush.bf16.msra.mxu0 %v2358
  %2401 = vmatpush.bf16.msra.mxu0 %v2356
  %2402 = vmatpush.bf16.msra.mxu0 %v2354
  %2403 = vmatpush.bf16.msra.mxu0 %v2352
  %2404 = vmatmul.bf16.gmra.mxu0 %v2285
  %v2405 = vpop.f32.mrf.mxu0
  %v2406 = vadd.f32 0.0, %v2405
  %v2407 = vpop.f32.mrf.mxu0
  %2408 = vdwg.mxu0
  %v2409 = vadd.f32 %v2282, %v2393
  %v2410 = vadd.f32 %v2283, %v2406
  %v2411 = vld [vmem:[%s4] sm:$0x3]
  %v2413 = vperm.slane %v2411, 0
  %v2414 = vperm.slane %v2411, 1
  %v2417 = vadd.f32 %v2409, %v2413
  %v2418 = vadd.f32 %v2410, %v2414
  %vm2419 = vcmp.gt.f32.partialorder %v2417, 0.0
  %vm2420 = vcmp.gt.f32.partialorder %v2418, 0.0
  %v2421 = vmul.f32 %v2417, 0.05
  %v2422 = vmul.f32 %v2418, 0.05
  %v2423 = vsel %vm2419, %v2417, %v2421
  %v2424 = vsel %vm2420, %v2418, %v2422
  %v2425 = vpack.c.bf16 %v2423, %v2423
  %v2426 = vpack.c.bf16 %v2424, %v2424
  %v2427 = vld [vmem:[%s5] sm:$0xf]
  %v2428 = vld [vmem:[%s5 + $0x4] sm:$0xf]
  %v2429 = vld [vmem:[%s5 + $0x8] sm:$0xf]
  %v2430 = vld [vmem:[%s5 + $0xc] sm:$0xf]
  %v2431 = vld [vmem:[%s5 + $0x10] sm:$0xf]
  %v2432 = vld [vmem:[%s5 + $0x14] sm:$0xf]
  %v2433 = vld [vmem:[%s5 + $0x18] sm:$0xf]
  %v2434 = vld [vmem:[%s5 + $0x1c] sm:$0xf]
  %v2435 = vld [vmem:[%s5 + $0x20] sm:$0xf]
  %v2436 = vld [vmem:[%s5 + $0x24] sm:$0xf]
  %v2437 = vld [vmem:[%s5 + $0x28] sm:$0xf]
  %v2438 = vld [vmem:[%s5 + $0x2c] sm:$0xf]
  %v2439 = vld [vmem:[%s5 + $0x30] sm:$0xf]
  %v2440 = vld [vmem:[%s5 + $0x34] sm:$0xf]
  %v2441 = vld [vmem:[%s5 + $0x38] sm:$0xf]
  %v2442 = vld [vmem:[%s5 + $0x3c] sm:$0xf]
  %v2443 = vld [vmem:[%s5 + $0x40] sm:$0xf]
  %v2444 = vld [vmem:[%s5 + $0x44] sm:$0xf]
  %v2445 = vld [vmem:[%s5 + $0x48] sm:$0xf]
  %v2446 = vld [vmem:[%s5 + $0x4c] sm:$0xf]
  %v2447 = vld [vmem:[%s5 + $0x50] sm:$0xf]
  %v2448 = vld [vmem:[%s5 + $0x54] sm:$0xf]
  %v2449 = vld [vmem:[%s5 + $0x58] sm:$0xf]
  %v2450 = vld [vmem:[%s5 + $0x5c] sm:$0xf]
  %v2451 = vld [vmem:[%s5 + $0x60] sm:$0xf]
  %v2452 = vld [vmem:[%s5 + $0x64] sm:$0xf]
  %v2453 = vld [vmem:[%s5 + $0x68] sm:$0xf]
  %v2454 = vld [vmem:[%s5 + $0x6c] sm:$0xf]
  %v2455 = vld [vmem:[%s5 + $0x70] sm:$0xf]
  %v2456 = vld [vmem:[%s5 + $0x74] sm:$0xf]
  %v2457 = vld [vmem:[%s5 + $0x78] sm:$0xf]
  %v2458 = vld [vmem:[%s5 + $0x7c] sm:$0xf]
  %v2459 = vld [vmem:[%s6] sm:$0x1]
  %v2461 = vperm.slane %v2459, 0
  %v2495 = vunpack.c.l.b16 %v2427
  %v2496 = vunpack.c.l.b16 %v2428
  %v2497 = vunpack.c.l.b16 %v2429
  %v2498 = vunpack.c.l.b16 %v2430
  %v2499 = vunpack.c.l.b16 %v2431
  %v2500 = vunpack.c.l.b16 %v2432
  %v2501 = vunpack.c.l.b16 %v2433
  %v2502 = vunpack.c.l.b16 %v2434
  %v2503 = vunpack.c.l.b16 %v2435
  %v2504 = vunpack.c.l.b16 %v2436
  %v2505 = vunpack.c.l.b16 %v2437
  %v2506 = vunpack.c.l.b16 %v2438
  %v2507 = vunpack.c.l.b16 %v2439
  %v2508 = vunpack.c.l.b16 %v2440
  %v2509 = vunpack.c.l.b16 %v2441
  %v2510 = vunpack.c.l.b16 %v2442
  %v2511 = vunpack.c.l.b16 %v2443
  %v2512 = vunpack.c.l.b16 %v2444
  %v2513 = vunpack.c.l.b16 %v2445
  %v2514 = vunpack.c.l.b16 %v2446
  %v2515 = vunpack.c.l.b16 %v2447
  %v2516 = vunpack.c.l.b16 %v2448
  %v2517 = vunpack.c.l.b16 %v2449
  %v2518 = vunpack.c.l.b16 %v2450
  %v2519 = vunpack.c.l.b16 %v2451
  %v2520 = vunpack.c.l.b16 %v2452
  %v2521 = vunpack.c.l.b16 %v2453
  %v2522 = vunpack.c.l.b16 %v2454
  %v2523 = vunpack.c.l.b16 %v2455
  %v2524 = vunpack.c.l.b16 %v2456
  %v2525 = vunpack.c.l.b16 %v2457
  %v2526 = vunpack.c.l.b16 %v2458
  %v2527 = vpack.c.b16 %v2496, %v2495
  %v2528 = vpack.c.b16 %v2498, %v2497
  %v2529 = vpack.c.b16 %v2500, %v2499
  %v2530 = vpack.c.b16 %v2502, %v2501
  %v2531 = vpack.c.b16 %v2504, %v2503
  %v2532 = vpack.c.b16 %v2506, %v2505
  %v2533 = vpack.c.b16 %v2508, %v2507
  %v2534 = vpack.c.b16 %v2510, %v2509
  %v2535 = vpack.c.b16 %v2512, %v2511
  %v2536 = vpack.c.b16 %v2514, %v2513
  %v2537 = vpack.c.b16 %v2516, %v2515
  %v2538 = vpack.c.b16 %v2518, %v2517
  %v2539 = vpack.c.b16 %v2520, %v2519
  %v2540 = vpack.c.b16 %v2522, %v2521
  %v2541 = vpack.c.b16 %v2524, %v2523
  %v2542 = vpack.c.b16 %v2526, %v2525
  %2559 = vmatpush.bf16.msra.mxu0 %v2534
  %2560 = vmatpush.bf16.msra.mxu0 %v2533
  %2561 = vmatpush.bf16.msra.mxu0 %v2532
  %2562 = vmatpush.bf16.msra.mxu0 %v2531
  %2563 = vmatpush.bf16.msra.mxu0 %v2530
  %2564 = vmatpush.bf16.msra.mxu0 %v2529
  %2565 = vmatpush.bf16.msra.mxu0 %v2528
  %2566 = vmatpush.bf16.msra.mxu0 %v2527
  %2567 = vmatmul.bf16.gmra.mxu0 %v2425
  %v2568 = vpop.f32.mrf.mxu0
  %v2569 = vadd.f32 %v2461, %v2568
  %v2570 = vpop.f32.mrf.mxu0
  %2571 = vdwg.mxu0
  %2572 = vmatpush.bf16.msra.mxu0 %v2542
  %2573 = vmatpush.bf16.msra.mxu0 %v2541
  %2574 = vmatpush.bf16.msra.mxu0 %v2540
  %2575 = vmatpush.bf16.msra.mxu0 %v2539
  %2576 = vmatpush.bf16.msra.mxu0 %v2538
  %2577 = vmatpush.bf16.msra.mxu0 %v2537
  %2578 = vmatpush.bf16.msra.mxu0 %v2536
  %2579 = vmatpush.bf16.msra.mxu0 %v2535
  %2580 = vmatmul.bf16.gmra.mxu0 %v2426
  %v2581 = vpop.f32.mrf.mxu0
  %v2582 = vadd.f32 %v2569, %v2581
  %v2583 = vpop.f32.mrf.mxu0
  %2584 = vdwg.mxu0
  %2585 = vst [vmem:[%s7] sm:$0xff] %v2582
  // Predicated region
  $region30: #{face_regression_forward.1} parent=0 // pred_check
    _
  $region31: #{face_regression_forward.1} parent=0 // pred_check_branch
    %2587 = sbr.rel (0) target = $region33
  $region32: #{face_regression_forward.1} parent=0 // pred_region
    _
  $region33: #{face_regression_forward.1} parent=0 // pred_fallthru
    _
  // Predicated region
  $region34: #{face_regression_forward.1} parent=0 // pred_check
    _
  $region35: #{face_regression_forward.1} parent=0 // pred_check_branch
    %2589 = sbr.rel (0) target = $region37
  $region36: #{face_regression_forward.1} parent=0 // pred_region
    _
  $region37: #{face_regression_forward.1} parent=0 // pred_fallthru
    _

</llo_original>
